<compile_context>
chip_gen: v7x
topology: tpu7x:2x2x1
jax: 0.10.0
libtpu: 0.0.40
codegen_flags: <defaults>
</compile_context>

<pallas_src>
import functools
import math

import jax
import jax.numpy as jnp
from jax import lax
from jax.experimental import pallas as pl
from jax.experimental.pallas import tpu as pltpu  # noqa: F401  (TPU backend)


# ------------------------- Pallas kernels -------------------------

def _convT_kernel(w_ref, p_ref, *rest, bn, relu, eps, inv_m, real_m):
    """Lane-dense conv-as-matmul: out(C, Mpad) = W(C, K) @ P(K, Mpad) [+ b],
    optionally fused training-mode BatchNorm (batch statistics over the real
    M = N*Ho*Wo columns, biased variance) and ReLU.  One MXU dot, one store."""
    if bn:
        g_ref, beta_ref, o_ref = rest
    else:
        b_ref, o_ref = rest

    acc = jnp.dot(w_ref[...], p_ref[...], preferred_element_type=jnp.float32)
    if bn:
        # No conv bias here: a per-channel constant is cancelled exactly by the
        # batch-stat mean subtraction below (dead work removed).
        # Padded lanes of `acc` are exact zeros (zero-padded patch columns, no
        # bias), so the mean sum needs no mask; only the variance does.
        mean = jnp.sum(acc, axis=1, keepdims=True) * inv_m
        cen = acc - mean
        if real_m != acc.shape[1]:
            lane = lax.broadcasted_iota(jnp.int32, acc.shape, 1)
            cen_stat = jnp.where(lane < real_m, cen, 0.0)
        else:
            cen_stat = cen
        var = jnp.sum(cen_stat * cen_stat, axis=1, keepdims=True) * inv_m
        scale = lax.rsqrt(var + eps) * g_ref[...]          # (C, 1), once
        acc = cen * scale + beta_ref[...]
    else:
        acc = acc + b_ref[...]                             # (C, 1) bcast
    if relu:
        acc = jnp.maximum(acc, 0.0)
    o_ref[...] = acc


def conv_matmul_T(wmat, patches, *, bias=None, gamma=None, beta=None,
                  relu=True, eps=1e-5, real_m=None):
    """(C, Mpad) = relu(bn(W @ P [+ b])).  Whole problem in one VMEM block."""
    C, K = wmat.shape
    K2, Mp = patches.shape
    assert K == K2
    bn = gamma is not None
    if real_m is None:
        real_m = Mp
    kern = functools.partial(_convT_kernel, bn=bn, relu=relu, eps=eps,
                             inv_m=1.0 / float(real_m), real_m=real_m)
    in_specs = [pl.BlockSpec((C, K), lambda: (0, 0)),
                pl.BlockSpec((K, Mp), lambda: (0, 0))]
    args = [wmat, patches]
    if bn:
        in_specs += [pl.BlockSpec((C, 1), lambda: (0, 0)),
                     pl.BlockSpec((C, 1), lambda: (0, 0))]
        args += [gamma.reshape(C, 1), beta.reshape(C, 1)]
    else:
        in_specs += [pl.BlockSpec((C, 1), lambda: (0, 0))]
        args += [bias.reshape(C, 1)]
    return pl.pallas_call(
        kern,
        out_shape=jax.ShapeDtypeStruct((C, Mp), jnp.float32),
        in_specs=in_specs,
        out_specs=pl.BlockSpec((C, Mp), lambda: (0, 0)),
    )(*args)


def _conv4_linear_kernel(w4_ref, p4_ref, b4_ref, wl_ref, bl_ref, o_ref, *,
                         batch, npos):
    """conv4 (lane-dense matmul) + bias + ReLU, consumed by the Linear head
    without leaving VMEM:  out.T(enc, N) = bl + sum_p WL_p(enc,64) @ z[:, p]."""
    z = jnp.dot(w4_ref[...], p4_ref[...], preferred_element_type=jnp.float32)
    z = jnp.maximum(z + b4_ref[...], 0.0)                 # (64, npos*batch)
    acc = bl_ref[...] + jnp.dot(wl_ref[0], z[:, 0:batch],
                                preferred_element_type=jnp.float32)
    for p in range(1, npos):                              # static unroll (9)
        acc = acc + jnp.dot(wl_ref[p], z[:, p * batch:(p + 1) * batch],
                            preferred_element_type=jnp.float32)
    o_ref[...] = acc


def conv4_linear(w4t, patches, b4, wl3T, bl, *, batch):
    C4, K4 = w4t.shape                                    # (64, 288)
    K4b, M4 = patches.shape                               # (288, 9*N)
    npos, enc, c4b = wl3T.shape                           # (9, enc, 64)
    assert K4 == K4b and c4b == C4 and M4 == npos * batch
    kern = functools.partial(_conv4_linear_kernel, batch=batch, npos=npos)
    return pl.pallas_call(
        kern,
        out_shape=jax.ShapeDtypeStruct((enc, batch), jnp.float32),
        in_specs=[pl.BlockSpec((C4, K4), lambda: (0, 0)),
                  pl.BlockSpec((K4, M4), lambda: (0, 0)),
                  pl.BlockSpec((C4, 1), lambda: (0, 0)),
                  pl.BlockSpec((npos, enc, C4), lambda: (0, 0, 0)),
                  pl.BlockSpec((enc, 1), lambda: (0, 0))],
        out_specs=pl.BlockSpec((enc, batch), lambda: (0, 0)),
    )(w4t, patches, b4.reshape(C4, 1), wl3T, bl.reshape(enc, 1))


# --------------- JAX glue (fused by XLA under jit, no transposes) ---------------

def _patches_cm(x_chwn, kh, kw, stride, pad):
    """im2col directly in the (K, M) orientation the kernels consume:
    (C, H, W, N) -> (kh*kw*C, Ho*Wo*N).  K is tap-major / C-minor, M is
    (h, w, n).  Only pad + strided slices + concat — no materialized transposes."""
    C, H, W, N = x_chwn.shape
    if pad:
        x_chwn = jnp.pad(x_chwn, ((0, 0), (pad, pad), (pad, pad), (0, 0)))
    Ho = (H + 2 * pad - kh) // stride + 1
    Wo = (W + 2 * pad - kw) // stride + 1
    taps = []
    for i in range(kh):
        for j in range(kw):
            taps.append(x_chwn[:, i:i + stride * (Ho - 1) + 1:stride,
                               j:j + stride * (Wo - 1) + 1:stride, :])
    p = jnp.concatenate(taps, axis=0)                     # (kh*kw*C, Ho, Wo, N)
    return p.reshape(kh * kw * C, Ho * Wo * N), Ho, Wo


def _pad_lanes(p, mult=128):
    """Zero-pad the M (lane) axis to a multiple of 128 so kernel stores are
    unmasked lane-dense.  Returns (padded_patches, real_M)."""
    K, M = p.shape
    Mp = ((M + mult - 1) // mult) * mult
    if Mp != M:
        p = jnp.pad(p, ((0, 0), (0, Mp - M)))
    return p, M


# ------------------------- Parameters -------------------------

def _uniform(key, shape, fan_in):
    bound = 1.0 / math.sqrt(fan_in)
    return jax.random.uniform(key, shape, jnp.float32, -bound, bound)


def init_params(key, encoded_dim, o1=3, o2=3):
    """PyTorch-layout parameters (same shapes/init scheme as the nn.Module)."""
    ks = jax.random.split(key, 10)
    p = {}
    p["w1"] = _uniform(ks[0], (8, 1, 4, 4), 1 * 4 * 4)      # Conv2d(1, 8, 4, s2, p1)
    p["b1"] = _uniform(ks[1], (8,), 1 * 4 * 4)
    p["w2"] = _uniform(ks[2], (16, 8, 3, 3), 8 * 3 * 3)     # Conv2d(8, 16, 3, s2, p1)
    p["b2"] = _uniform(ks[3], (16,), 8 * 3 * 3)
    p["g2"] = jnp.ones((16,), jnp.float32)                  # BatchNorm2d(16)
    p["be2"] = jnp.zeros((16,), jnp.float32)
    p["w3"] = _uniform(ks[4], (32, 16, 4, 4), 16 * 4 * 4)   # Conv2d(16, 32, 4, s2, p1)
    p["b3"] = _uniform(ks[5], (32,), 16 * 4 * 4)
    p["g3"] = jnp.ones((32,), jnp.float32)                  # BatchNorm2d(32)
    p["be3"] = jnp.zeros((32,), jnp.float32)
    p["w4"] = _uniform(ks[6], (64, 32, 3, 3), 32 * 3 * 3)   # Conv2d(32, 64, 3, s2, p0)
    p["b4"] = _uniform(ks[7], (64,), 32 * 3 * 3)
    flat = 64 * o1 * o2
    p["wl"] = _uniform(ks[8], (encoded_dim, flat), flat)    # Linear(64*o1*o2, enc)
    p["bl"] = _uniform(ks[9], (encoded_dim,), flat)
    return p


def prepare_params(p, o1=3, o2=3):
    """One-time layout conversion into kernel-friendly matmul matrices."""
    def conv_T(w):        # (Cout, Cin, kh, kw) -> (Cout, kh*kw*Cin), tap-major
        Cout, Cin, kh, kw = w.shape
        return jnp.transpose(w, (0, 2, 3, 1)).reshape(Cout, kh * kw * Cin)

    kp = {}
    kp["w1t"], kp["b1"] = conv_T(p["w1"]), p["b1"]
    # b2/b3 intentionally dropped: cancelled by batch-stat BatchNorm.
    kp["w2t"] = conv_T(p["w2"])
    kp["g2"], kp["be2"] = p["g2"], p["be2"]
    kp["w3t"] = conv_T(p["w3"])
    kp["g3"], kp["be3"] = p["g3"], p["be3"]
    kp["w4t"], kp["b4"] = conv_T(p["w4"]), p["b4"]
    # PyTorch Flatten is NCHW order (flat = c*o1*o2 + h*o2 + w); pre-split the
    # Linear weight per spatial position p = h*o2 + w:  wl3T[p][e, c].
    enc = p["wl"].shape[0]
    kp["wl3T"] = jnp.transpose(p["wl"].reshape(enc, 64, o1 * o2), (2, 0, 1))
    kp["bl"] = p["bl"]
    return kp


# ------------------------- Forward (matches Encoder.forward) -------------------------

@jax.jit
def encoder_forward(kp, x_nchw):
    N = x_nchw.shape[0]
    x = jnp.transpose(x_nchw, (1, 2, 3, 0))                 # (C=1, H, W, N)

    # Conv(1->8, k4, s2, p1) + ReLU
    pm, Ho, Wo = _patches_cm(x, 4, 4, 2, 1)
    pm, M = _pad_lanes(pm)
    y = conv_matmul_T(kp["w1t"], pm, bias=kp["b1"], relu=True, real_m=M)
    x = y[:, :M].reshape(8, Ho, Wo, N)

    # Conv(8->16, k3, s2, p1) + BatchNorm(batch stats) + ReLU, fused, no bias
    pm, Ho, Wo = _patches_cm(x, 3, 3, 2, 1)
    pm, M = _pad_lanes(pm)
    y = conv_matmul_T(kp["w2t"], pm, gamma=kp["g2"], beta=kp["be2"],
                      relu=True, real_m=M)
    x = y[:, :M].reshape(16, Ho, Wo, N)

    # Conv(16->32, k4, s2, p1) + BatchNorm + ReLU, fused, no bias
    pm, Ho, Wo = _patches_cm(x, 4, 4, 2, 1)
    pm, M = _pad_lanes(pm)
    y = conv_matmul_T(kp["w3t"], pm, gamma=kp["g3"], beta=kp["be3"],
                      relu=True, real_m=M)
    x = y[:, :M].reshape(32, Ho, Wo, N)

    # Conv(32->64, k3, s2, p0) + ReLU + Flatten + Linear — one fused kernel
    pm, Ho, Wo = _patches_cm(x, 3, 3, 2, 0)                 # (288, 9*N), M=(h,w,n)
    outT = conv4_linear(kp["w4t"], pm, kp["b4"], kp["wl3T"], kp["bl"], batch=N)
    return outT.T                                           # (N, encoded_dim)


# ------------------------- Pure-JAX reference (for self-check) -------------------------

@jax.jit
def encoder_reference(p, x, eps=1e-5):
    def conv(x, w, b, stride, pad):
        y = lax.conv_general_dilated(x, w, (stride, stride),
                                     [(pad, pad), (pad, pad)],
                                     dimension_numbers=("NCHW", "OIHW", "NCHW"))
        return y + b.reshape(1, -1, 1, 1)

    def bn(x, g, be):
        mean = jnp.mean(x, axis=(0, 2, 3), keepdims=True)
        var = jnp.mean((x - mean) ** 2, axis=(0, 2, 3), keepdims=True)
        return ((x - mean) * lax.rsqrt(var + eps) * g.reshape(1, -1, 1, 1)
                + be.reshape(1, -1, 1, 1))

    y = jax.nn.relu(conv(x, p["w1"], p["b1"], 2, 1))
    y = jax.nn.relu(bn(conv(y, p["w2"], p["b2"], 2, 1), p["g2"], p["be2"]))
    y = jax.nn.relu(bn(conv(y, p["w3"], p["b3"], 2, 1), p["g3"], p["be3"]))
    y = jax.nn.relu(conv(y, p["w4"], p["b4"], 2, 0))
    y = y.reshape(y.shape[0], -1)
    return y @ p["wl"].T + p["bl"]


if __name__ == "__main__":
    key = jax.random.PRNGKey(0)
    pkey, xkey = jax.random.split(key)

    encoded_dim = 32
    params = init_params(pkey, encoded_dim=encoded_dim, o1=3, o2=3)
    kparams = prepare_params(params, o1=3, o2=3)            # one-time layout prep

    # o1=o2=3 implies a 56x56 input: 56 -> 28 -> 14 -> 7 -> 3 spatial.
    x = jax.random.normal(xkey, (2, 1, 56, 56), jnp.float32)

    out = jax.block_until_ready(encoder_forward(kparams, x))
    assert out.shape == (2, encoded_dim), out.shape
    assert bool(jnp.all(jnp.isfinite(out)))

    # Loose tolerance: separates layout bugs (O(1) errors) from MXU default-
    # precision noise; not a bit-parity claim.
    ref = jax.block_until_ready(encoder_reference(params, x))
    err = float(jnp.max(jnp.abs(out - ref)))
    assert err < 1e-1, f"max abs err vs reference: {err}"

    print("KERNEL_OK")
</pallas_src>

<mosaic_0001>
module attributes {stable_mosaic.version = 11 : i64} {
  func.func @_convT_kernel(%arg0: memref<8x16xf32, #tpu.memory_space<vmem>>, %arg1: memref<16x1664xf32, #tpu.memory_space<vmem>>, %arg2: memref<8x1xf32, #tpu.memory_space<vmem>>, %arg3: memref<8x1664xf32, #tpu.memory_space<vmem>>) attributes {dimension_semantics = [], scalar_prefetch = 0 : i64, scratch_operands = 0 : i64, tpu.core_type = #tpu.core_type<tc>} {
    %c0 = arith.constant 0 : index
    %c0_0 = arith.constant 0 : index
    %0 = vector.load %arg0[%c0, %c0_0] : memref<8x16xf32, #tpu.memory_space<vmem>>, vector<8x16xf32>
    %c0_1 = arith.constant 0 : index
    %c0_2 = arith.constant 0 : index
    %1 = vector.load %arg1[%c0_1, %c0_2] : memref<16x1664xf32, #tpu.memory_space<vmem>>, vector<16x1664xf32>
    %cst = arith.constant dense<0.000000e+00> : vector<8x1664xf32>
    %2 = tpu.matmul %0, %1, %cst {dimension_numbers = #tpu.dot_dimension_numbers<[1], [0], [0], [1], [0, 0, 1, 1], [], []>} : vector<8x16xf32>, vector<16x1664xf32>, vector<8x1664xf32> -> vector<8x1664xf32>
    %c0_3 = arith.constant 0 : index
    %c0_4 = arith.constant 0 : index
    %3 = vector.load %arg2[%c0_3, %c0_4] : memref<8x1xf32, #tpu.memory_space<vmem>>, vector<8x1xf32>
    %4 = vector.broadcast %3 : vector<8x1xf32> to vector<8x1664xf32>
    %5 = arith.addf %2, %4 : vector<8x1664xf32>
    %cst_5 = arith.constant 0.000000e+00 : f32
    %6 = vector.broadcast %cst_5 : f32 to vector<8x1664xf32>
    %7 = arith.maximumf %5, %6 : vector<8x1664xf32>
    %c0_6 = arith.constant 0 : index
    %c0_7 = arith.constant 0 : index
    %8 = vector.load %arg3[%c0_6, %c0_7] : memref<8x1664xf32, #tpu.memory_space<vmem>>, vector<8x1664xf32>
    tpu.vector_store %arg3[%c0_6, %c0_7], %7 {strides = array<i32>} : memref<8x1664xf32, #tpu.memory_space<vmem>>, vector<8x1664xf32>,
    return
  }
}

module attributes {stable_mosaic.version = 11 : i64} {
  func.func @_convT_kernel(%arg0: memref<16x72xf32, #tpu.memory_space<vmem>>, %arg1: memref<72x512xf32, #tpu.memory_space<vmem>>, %arg2: memref<16x1xf32, #tpu.memory_space<vmem>>, %arg3: memref<16x1xf32, #tpu.memory_space<vmem>>, %arg4: memref<16x512xf32, #tpu.memory_space<vmem>>) attributes {dimension_semantics = [], scalar_prefetch = 0 : i64, scratch_operands = 0 : i64, tpu.core_type = #tpu.core_type<tc>} {
    %c0 = arith.constant 0 : index
    %c0_0 = arith.constant 0 : index
    %0 = vector.load %arg0[%c0, %c0_0] : memref<16x72xf32, #tpu.memory_space<vmem>>, vector<16x72xf32>
    %c0_1 = arith.constant 0 : index
    %c0_2 = arith.constant 0 : index
    %1 = vector.load %arg1[%c0_1, %c0_2] : memref<72x512xf32, #tpu.memory_space<vmem>>, vector<72x512xf32>
    %cst = arith.constant dense<0.000000e+00> : vector<16x512xf32>
    %2 = tpu.matmul %0, %1, %cst {dimension_numbers = #tpu.dot_dimension_numbers<[1], [0], [0], [1], [0, 0, 1, 1], [], []>} : vector<16x72xf32>, vector<72x512xf32>, vector<16x512xf32> -> vector<16x512xf32>
    %cst_3 = arith.constant dense<0.000000e+00> : vector<16xf32>
    %3 = vector.multi_reduction <add>, %2, %cst_3 [1] : vector<16x512xf32> to vector<16xf32>
    %4 = vector.shape_cast %3 : vector<16xf32> to vector<16x1xf32>
    %cst_4 = arith.constant 0.00255102036 : f32
    %5 = vector.broadcast %cst_4 : f32 to vector<16x1xf32>
    %6 = arith.mulf %4, %5 : vector<16x1xf32>
    %7 = vector.broadcast %6 : vector<16x1xf32> to vector<16x512xf32>
    %8 = arith.subf %2, %7 : vector<16x512xf32>
    %9 = tpu.iota {dimensions = array<i32: 1>} : vector<16x512xi32>
    %c392_i32 = arith.constant 392 : i32
    %10 = vector.broadcast %c392_i32 : i32 to vector<16x512xi32>
    %11 = arith.cmpi slt, %9, %10 : vector<16x512xi32>
    %cst_5 = arith.constant 0.000000e+00 : f32
    %12 = vector.broadcast %cst_5 : f32 to vector<16x512xf32>
    %13 = arith.select %11, %8, %12 : vector<16x512xi1>, vector<16x512xf32>
    %14 = arith.mulf %13, %13 : vector<16x512xf32>
    %cst_6 = arith.constant dense<0.000000e+00> : vector<16xf32>
    %15 = vector.multi_reduction <add>, %14, %cst_6 [1] : vector<16x512xf32> to vector<16xf32>
    %16 = vector.shape_cast %15 : vector<16xf32> to vector<16x1xf32>
    %cst_7 = arith.constant 0.00255102036 : f32
    %17 = vector.broadcast %cst_7 : f32 to vector<16x1xf32>
    %18 = arith.mulf %16, %17 : vector<16x1xf32>
    %cst_8 = arith.constant 9.99999974E-6 : f32
    %19 = vector.broadcast %cst_8 : f32 to vector<16x1xf32>
    %20 = arith.addf %18, %19 : vector<16x1xf32>
    %21 = math.rsqrt %20 : vector<16x1xf32>
    %c0_9 = arith.constant 0 : index
    %c0_10 = arith.constant 0 : index
    %22 = vector.load %arg2[%c0_9, %c0_10] : memref<16x1xf32, #tpu.memory_space<vmem>>, vector<16x1xf32>
    %23 = arith.mulf %21, %22 : vector<16x1xf32>
    %24 = vector.broadcast %23 : vector<16x1xf32> to vector<16x512xf32>
    %25 = arith.mulf %8, %24 : vector<16x512xf32>
    %c0_11 = arith.constant 0 : index
    %c0_12 = arith.constant 0 : index
    %26 = vector.load %arg3[%c0_11, %c0_12] : memref<16x1xf32, #tpu.memory_space<vmem>>, vector<16x1xf32>
    %27 = vector.broadcast %26 : vector<16x1xf32> to vector<16x512xf32>
    %28 = arith.addf %25, %27 : vector<16x512xf32>
    %cst_13 = arith.constant 0.000000e+00 : f32
    %29 = vector.broadcast %cst_13 : f32 to vector<16x512xf32>
    %30 = arith.maximumf %28, %29 : vector<16x512xf32>
    %c0_14 = arith.constant 0 : index
    %c0_15 = arith.constant 0 : index
    %31 = vector.load %arg4[%c0_14, %c0_15] : memref<16x512xf32, #tpu.memory_space<vmem>>, vector<16x512xf32>
    tpu.vector_store %arg4[%c0_14, %c0_15], %30 {strides = array<i32>} : memref<16x512xf32, #tpu.memory_space<vmem>>, vector<16x512xf32>,
    return
  }
}

module attributes {stable_mosaic.version = 11 : i64} {
  func.func @_convT_kernel(%arg0: memref<32x256xf32, #tpu.memory_space<vmem>>, %arg1: memref<256x128xf32, #tpu.memory_space<vmem>>, %arg2: memref<32x1xf32, #tpu.memory_space<vmem>>, %arg3: memref<32x1xf32, #tpu.memory_space<vmem>>, %arg4: memref<32x128xf32, #tpu.memory_space<vmem>>) attributes {dimension_semantics = [], scalar_prefetch = 0 : i64, scratch_operands = 0 : i64, tpu.core_type = #tpu.core_type<tc>} {
    %c0 = arith.constant 0 : index
    %c0_0 = arith.constant 0 : index
    %0 = vector.load %arg0[%c0, %c0_0] : memref<32x256xf32, #tpu.memory_space<vmem>>, vector<32x256xf32>
    %c0_1 = arith.constant 0 : index
    %c0_2 = arith.constant 0 : index
    %1 = vector.load %arg1[%c0_1, %c0_2] : memref<256x128xf32, #tpu.memory_space<vmem>>, vector<256x128xf32>
    %cst = arith.constant dense<0.000000e+00> : vector<32x128xf32>
    %2 = tpu.matmul %0, %1, %cst {dimension_numbers = #tpu.dot_dimension_numbers<[1], [0], [0], [1], [0, 0, 1, 1], [], []>} : vector<32x256xf32>, vector<256x128xf32>, vector<32x128xf32> -> vector<32x128xf32>
    %cst_3 = arith.constant dense<0.000000e+00> : vector<32xf32>
    %3 = vector.multi_reduction <add>, %2, %cst_3 [1] : vector<32x128xf32> to vector<32xf32>
    %4 = vector.shape_cast %3 : vector<32xf32> to vector<32x1xf32>
    %cst_4 = arith.constant 0.0102040814 : f32
    %5 = vector.broadcast %cst_4 : f32 to vector<32x1xf32>
    %6 = arith.mulf %4, %5 : vector<32x1xf32>
    %7 = vector.broadcast %6 : vector<32x1xf32> to vector<32x128xf32>
    %8 = arith.subf %2, %7 : vector<32x128xf32>
    %9 = tpu.iota {dimensions = array<i32: 1>} : vector<32x128xi32>
    %c98_i32 = arith.constant 98 : i32
    %10 = vector.broadcast %c98_i32 : i32 to vector<32x128xi32>
    %11 = arith.cmpi slt, %9, %10 : vector<32x128xi32>
    %cst_5 = arith.constant 0.000000e+00 : f32
    %12 = vector.broadcast %cst_5 : f32 to vector<32x128xf32>
    %13 = arith.select %11, %8, %12 : vector<32x128xi1>, vector<32x128xf32>
    %14 = arith.mulf %13, %13 : vector<32x128xf32>
    %cst_6 = arith.constant dense<0.000000e+00> : vector<32xf32>
    %15 = vector.multi_reduction <add>, %14, %cst_6 [1] : vector<32x128xf32> to vector<32xf32>
    %16 = vector.shape_cast %15 : vector<32xf32> to vector<32x1xf32>
    %cst_7 = arith.constant 0.0102040814 : f32
    %17 = vector.broadcast %cst_7 : f32 to vector<32x1xf32>
    %18 = arith.mulf %16, %17 : vector<32x1xf32>
    %cst_8 = arith.constant 9.99999974E-6 : f32
    %19 = vector.broadcast %cst_8 : f32 to vector<32x1xf32>
    %20 = arith.addf %18, %19 : vector<32x1xf32>
    %21 = math.rsqrt %20 : vector<32x1xf32>
    %c0_9 = arith.constant 0 : index
    %c0_10 = arith.constant 0 : index
    %22 = vector.load %arg2[%c0_9, %c0_10] : memref<32x1xf32, #tpu.memory_space<vmem>>, vector<32x1xf32>
    %23 = arith.mulf %21, %22 : vector<32x1xf32>
    %24 = vector.broadcast %23 : vector<32x1xf32> to vector<32x128xf32>
    %25 = arith.mulf %8, %24 : vector<32x128xf32>
    %c0_11 = arith.constant 0 : index
    %c0_12 = arith.constant 0 : index
    %26 = vector.load %arg3[%c0_11, %c0_12] : memref<32x1xf32, #tpu.memory_space<vmem>>, vector<32x1xf32>
    %27 = vector.broadcast %26 : vector<32x1xf32> to vector<32x128xf32>
    %28 = arith.addf %25, %27 : vector<32x128xf32>
    %cst_13 = arith.constant 0.000000e+00 : f32
    %29 = vector.broadcast %cst_13 : f32 to vector<32x128xf32>
    %30 = arith.maximumf %28, %29 : vector<32x128xf32>
    %c0_14 = arith.constant 0 : index
    %c0_15 = arith.constant 0 : index
    %31 = vector.load %arg4[%c0_14, %c0_15] : memref<32x128xf32, #tpu.memory_space<vmem>>, vector<32x128xf32>
    tpu.vector_store %arg4[%c0_14, %c0_15], %30 {strides = array<i32>} : memref<32x128xf32, #tpu.memory_space<vmem>>, vector<32x128xf32>,
    return
  }
}

module attributes {stable_mosaic.version = 11 : i64} {
  func.func @_conv4_linear_kernel(%arg0: memref<64x288xf32, #tpu.memory_space<vmem>>, %arg1: memref<288x18xf32, #tpu.memory_space<vmem>>, %arg2: memref<64x1xf32, #tpu.memory_space<vmem>>, %arg3: memref<9x32x64xf32, #tpu.memory_space<vmem>>, %arg4: memref<32x1xf32, #tpu.memory_space<vmem>>, %arg5: memref<32x2xf32, #tpu.memory_space<vmem>>) attributes {dimension_semantics = [], scalar_prefetch = 0 : i64, scratch_operands = 0 : i64, tpu.core_type = #tpu.core_type<tc>} {
    %c0 = arith.constant 0 : index
    %c0_0 = arith.constant 0 : index
    %0 = vector.load %arg0[%c0, %c0_0] : memref<64x288xf32, #tpu.memory_space<vmem>>, vector<64x288xf32>
    %c0_1 = arith.constant 0 : index
    %c0_2 = arith.constant 0 : index
    %1 = vector.load %arg1[%c0_1, %c0_2] : memref<288x18xf32, #tpu.memory_space<vmem>>, vector<288x18xf32>
    %cst = arith.constant dense<0.000000e+00> : vector<64x18xf32>
    %2 = tpu.matmul %0, %1, %cst {dimension_numbers = #tpu.dot_dimension_numbers<[1], [0], [0], [1], [0, 0, 1, 1], [], []>} : vector<64x288xf32>, vector<288x18xf32>, vector<64x18xf32> -> vector<64x18xf32>
    %c0_3 = arith.constant 0 : index
    %c0_4 = arith.constant 0 : index
    %3 = vector.load %arg2[%c0_3, %c0_4] : memref<64x1xf32, #tpu.memory_space<vmem>>, vector<64x1xf32>
    %4 = vector.broadcast %3 : vector<64x1xf32> to vector<64x18xf32>
    %5 = arith.addf %2, %4 : vector<64x18xf32>
    %cst_5 = arith.constant 0.000000e+00 : f32
    %6 = vector.broadcast %cst_5 : f32 to vector<64x18xf32>
    %7 = arith.maximumf %5, %6 : vector<64x18xf32>
    %c0_6 = arith.constant 0 : index
    %c0_7 = arith.constant 0 : index
    %8 = vector.load %arg4[%c0_6, %c0_7] : memref<32x1xf32, #tpu.memory_space<vmem>>, vector<32x1xf32>
    %c0_8 = arith.constant 0 : index
    %c0_9 = arith.constant 0 : index
    %c0_10 = arith.constant 0 : index
    %9 = vector.load %arg3[%c0_8, %c0_9, %c0_10] : memref<9x32x64xf32, #tpu.memory_space<vmem>>, vector<1x32x64xf32>
    %10 = vector.shape_cast %9 : vector<1x32x64xf32> to vector<32x64xf32>
    %11 = vector.extract_strided_slice %7 {offsets = [0, 0], sizes = [64, 2], strides = [1, 1]} : vector<64x18xf32> to vector<64x2xf32>
    %cst_11 = arith.constant dense<0.000000e+00> : vector<32x2xf32>
    %12 = tpu.matmul %10, %11, %cst_11 {dimension_numbers = #tpu.dot_dimension_numbers<[1], [0], [0], [1], [0, 0, 1, 1], [], []>} : vector<32x64xf32>, vector<64x2xf32>, vector<32x2xf32> -> vector<32x2xf32>
    %13 = vector.broadcast %8 : vector<32x1xf32> to vector<32x2xf32>
    %14 = arith.addf %13, %12 : vector<32x2xf32>
    %c1 = arith.constant 1 : index
    %c0_12 = arith.constant 0 : index
    %c0_13 = arith.constant 0 : index
    %15 = vector.load %arg3[%c1, %c0_12, %c0_13] : memref<9x32x64xf32, #tpu.memory_space<vmem>>, vector<1x32x64xf32>
    %16 = vector.shape_cast %15 : vector<1x32x64xf32> to vector<32x64xf32>
    %17 = vector.extract_strided_slice %7 {offsets = [0, 2], sizes = [64, 2], strides = [1, 1]} : vector<64x18xf32> to vector<64x2xf32>
    %cst_14 = arith.constant dense<0.000000e+00> : vector<32x2xf32>
    %18 = tpu.matmul %16, %17, %cst_14 {dimension_numbers = #tpu.dot_dimension_numbers<[1], [0], [0], [1], [0, 0, 1, 1], [], []>} : vector<32x64xf32>, vector<64x2xf32>, vector<32x2xf32> -> vector<32x2xf32>
    %19 = arith.addf %14, %18 : vector<32x2xf32>
    %c2 = arith.constant 2 : index
    %c0_15 = arith.constant 0 : index
    %c0_16 = arith.constant 0 : index
    %20 = vector.load %arg3[%c2, %c0_15, %c0_16] : memref<9x32x64xf32, #tpu.memory_space<vmem>>, vector<1x32x64xf32>
    %21 = vector.shape_cast %20 : vector<1x32x64xf32> to vector<32x64xf32>
    %22 = vector.extract_strided_slice %7 {offsets = [0, 4], sizes = [64, 2], strides = [1, 1]} : vector<64x18xf32> to vector<64x2xf32>
    %cst_17 = arith.constant dense<0.000000e+00> : vector<32x2xf32>
    %23 = tpu.matmul %21, %22, %cst_17 {dimension_numbers = #tpu.dot_dimension_numbers<[1], [0], [0], [1], [0, 0, 1, 1], [], []>} : vector<32x64xf32>, vector<64x2xf32>, vector<32x2xf32> -> vector<32x2xf32>
    %24 = arith.addf %19, %23 : vector<32x2xf32>
    %c3 = arith.constant 3 : index
    %c0_18 = arith.constant 0 : index
    %c0_19 = arith.constant 0 : index
    %25 = vector.load %arg3[%c3, %c0_18, %c0_19] : memref<9x32x64xf32, #tpu.memory_space<vmem>>, vector<1x32x64xf32>
    %26 = vector.shape_cast %25 : vector<1x32x64xf32> to vector<32x64xf32>
    %27 = vector.extract_strided_slice %7 {offsets = [0, 6], sizes = [64, 2], strides = [1, 1]} : vector<64x18xf32> to vector<64x2xf32>
    %cst_20 = arith.constant dense<0.000000e+00> : vector<32x2xf32>
    %28 = tpu.matmul %26, %27, %cst_20 {dimension_numbers = #tpu.dot_dimension_numbers<[1], [0], [0], [1], [0, 0, 1, 1], [], []>} : vector<32x64xf32>, vector<64x2xf32>, vector<32x2xf32> -> vector<32x2xf32>
    %29 = arith.addf %24, %28 : vector<32x2xf32>
    %c4 = arith.constant 4 : index
    %c0_21 = arith.constant 0 : index
    %c0_22 = arith.constant 0 : index
    %30 = vector.load %arg3[%c4, %c0_21, %c0_22] : memref<9x32x64xf32, #tpu.memory_space<vmem>>, vector<1x32x64xf32>
    %31 = vector.shape_cast %30 : vector<1x32x64xf32> to vector<32x64xf32>
    %32 = vector.extract_strided_slice %7 {offsets = [0, 8], sizes = [64, 2], strides = [1, 1]} : vector<64x18xf32> to vector<64x2xf32>
    %cst_23 = arith.constant dense<0.000000e+00> : vector<32x2xf32>
    %33 = tpu.matmul %31, %32, %cst_23 {dimension_numbers = #tpu.dot_dimension_numbers<[1], [0], [0], [1], [0, 0, 1, 1], [], []>} : vector<32x64xf32>, vector<64x2xf32>, vector<32x2xf32> -> vector<32x2xf32>
    %34 = arith.addf %29, %33 : vector<32x2xf32>
    %c5 = arith.constant 5 : index
    %c0_24 = arith.constant 0 : index
    %c0_25 = arith.constant 0 : index
    %35 = vector.load %arg3[%c5, %c0_24, %c0_25] : memref<9x32x64xf32, #tpu.memory_space<vmem>>, vector<1x32x64xf32>
    %36 = vector.shape_cast %35 : vector<1x32x64xf32> to vector<32x64xf32>
    %37 = vector.extract_strided_slice %7 {offsets = [0, 10], sizes = [64, 2], strides = [1, 1]} : vector<64x18xf32> to vector<64x2xf32>
    %cst_26 = arith.constant dense<0.000000e+00> : vector<32x2xf32>
    %38 = tpu.matmul %36, %37, %cst_26 {dimension_numbers = #tpu.dot_dimension_numbers<[1], [0], [0], [1], [0, 0, 1, 1], [], []>} : vector<32x64xf32>, vector<64x2xf32>, vector<32x2xf32> -> vector<32x2xf32>
    %39 = arith.addf %34, %38 : vector<32x2xf32>
    %c6 = arith.constant 6 : index
    %c0_27 = arith.constant 0 : index
    %c0_28 = arith.constant 0 : index
    %40 = vector.load %arg3[%c6, %c0_27, %c0_28] : memref<9x32x64xf32, #tpu.memory_space<vmem>>, vector<1x32x64xf32>
    %41 = vector.shape_cast %40 : vector<1x32x64xf32> to vector<32x64xf32>
    %42 = vector.extract_strided_slice %7 {offsets = [0, 12], sizes = [64, 2], strides = [1, 1]} : vector<64x18xf32> to vector<64x2xf32>
    %cst_29 = arith.constant dense<0.000000e+00> : vector<32x2xf32>
    %43 = tpu.matmul %41, %42, %cst_29 {dimension_numbers = #tpu.dot_dimension_numbers<[1], [0], [0], [1], [0, 0, 1, 1], [], []>} : vector<32x64xf32>, vector<64x2xf32>, vector<32x2xf32> -> vector<32x2xf32>
    %44 = arith.addf %39, %43 : vector<32x2xf32>
    %c7 = arith.constant 7 : index
    %c0_30 = arith.constant 0 : index
    %c0_31 = arith.constant 0 : index
    %45 = vector.load %arg3[%c7, %c0_30, %c0_31] : memref<9x32x64xf32, #tpu.memory_space<vmem>>, vector<1x32x64xf32>
    %46 = vector.shape_cast %45 : vector<1x32x64xf32> to vector<32x64xf32>
    %47 = vector.extract_strided_slice %7 {offsets = [0, 14], sizes = [64, 2], strides = [1, 1]} : vector<64x18xf32> to vector<64x2xf32>
    %cst_32 = arith.constant dense<0.000000e+00> : vector<32x2xf32>
    %48 = tpu.matmul %46, %47, %cst_32 {dimension_numbers = #tpu.dot_dimension_numbers<[1], [0], [0], [1], [0, 0, 1, 1], [], []>} : vector<32x64xf32>, vector<64x2xf32>, vector<32x2xf32> -> vector<32x2xf32>
    %49 = arith.addf %44, %48 : vector<32x2xf32>
    %c8 = arith.constant 8 : index
    %c0_33 = arith.constant 0 : index
    %c0_34 = arith.constant 0 : index
    %50 = vector.load %arg3[%c8, %c0_33, %c0_34] : memref<9x32x64xf32, #tpu.memory_space<vmem>>, vector<1x32x64xf32>
    %51 = vector.shape_cast %50 : vector<1x32x64xf32> to vector<32x64xf32>
    %52 = vector.extract_strided_slice %7 {offsets = [0, 16], sizes = [64, 2], strides = [1, 1]} : vector<64x18xf32> to vector<64x2xf32>
    %cst_35 = arith.constant dense<0.000000e+00> : vector<32x2xf32>
    %53 = tpu.matmul %51, %52, %cst_35 {dimension_numbers = #tpu.dot_dimension_numbers<[1], [0], [0], [1], [0, 0, 1, 1], [], []>} : vector<32x64xf32>, vector<64x2xf32>, vector<32x2xf32> -> vector<32x2xf32>
    %54 = arith.addf %49, %53 : vector<32x2xf32>
    %c0_36 = arith.constant 0 : index
    %c0_37 = arith.constant 0 : index
    %55 = vector.load %arg5[%c0_36, %c0_37] : memref<32x2xf32, #tpu.memory_space<vmem>>, vector<32x2xf32>
    tpu.vector_store %arg5[%c0_36, %c0_37], %54 {strides = array<i32>} : memref<32x2xf32, #tpu.memory_space<vmem>>, vector<32x2xf32>,
    return
  }
}

</mosaic_0001>

<llo_original>
// kernel: encoder_forward.4
$region0: #{encoder_forward.4}
  #allocation0 [shape = 'u32[]', space=smem, size = 0x4, offset = 0x4, fixed_abs, tag = 'smem constant byte address 0x4 - core index']
  #allocation1 [shape = 'u32[144,128]{1,0:T(1,128)}', space=vmem, size = 0x12000, scoped, tag = 'internal scratch']
  %s0 = inlined_call_operand.vmem [shape: f32[8,16], index: 0, kind: input, shape index: {}]
  %s1 = inlined_call_operand.vmem [shape: f32[16,1664], index: 1, kind: input, shape index: {}]
  %s2 = inlined_call_operand.vmem [shape: f32[8,1], index: 2, kind: input, shape index: {}]
  %s3 = inlined_call_operand.vmem [shape: f32[8,1664], index: 3, kind: output, shape index: {}]
  %s4 = sld [smem:[#allocation0]]
  $region22: #{encoder_forward.4} parent=0
    _
  %s6 = ssub.s32 1, %s4
  %s7 = scalar_select 0, %s6, %s4
  // Predicated region
  $region2: #{encoder_forward.4} parent=0 // pred_check
    _
  $region3: #{encoder_forward.4} parent=0 // pred_check_branch
    %9 = sbr.rel (0) target = $region5
  $region4: #{encoder_forward.4} parent=0 // pred_region
    _
  $region5: #{encoder_forward.4} parent=0 // pred_fallthru
    _
  // Predicated region
  $region6: #{encoder_forward.4} parent=0 // pred_check
    _
  $region7: #{encoder_forward.4} parent=0 // pred_check_branch
    %11 = sbr.rel (0) target = $region9
  $region8: #{encoder_forward.4} parent=0 // pred_region
    _
  $region9: #{encoder_forward.4} parent=0 // pred_fallthru
    _
  // Predicated region
  $region10: #{encoder_forward.4} parent=0 // pred_check
    _
  $region11: #{encoder_forward.4} parent=0 // pred_check_branch
    %13 = sbr.rel (0) target = $region13
  $region12: #{encoder_forward.4} parent=0 // pred_region
    _
  $region13: #{encoder_forward.4} parent=0 // pred_fallthru
    _
  %v14 = vld [vmem:[%s0] sm:$0xff]
  %v15 = vld [vmem:[%s1] sm:$0xff]
  %v16 = vld [vmem:[%s1 + $0x8] sm:$0xff]
  %v17 = vld [vmem:[%s1 + $0x10] sm:$0xff]
  %v18 = vld [vmem:[%s1 + $0x18] sm:$0xff]
  %v19 = vld [vmem:[%s1 + $0x20] sm:$0xff]
  %v20 = vld [vmem:[%s1 + $0x28] sm:$0xff]
  %v21 = vld [vmem:[%s1 + $0x30] sm:$0xff]
  %v22 = vld [vmem:[%s1 + $0x38] sm:$0xff]
  %v23 = vld [vmem:[%s1 + $0x40] sm:$0xff]
  %v24 = vld [vmem:[%s1 + $0x48] sm:$0xff]
  %v25 = vld [vmem:[%s1 + $0x50] sm:$0xff]
  %v26 = vld [vmem:[%s1 + $0x58] sm:$0xff]
  %v27 = vld [vmem:[%s1 + $0x60] sm:$0xff]
  %v28 = vld [vmem:[%s1 + $0x68] sm:$0xff]
  %v29 = vld [vmem:[%s1 + $0x70] sm:$0xff]
  %v30 = vld [vmem:[%s1 + $0x78] sm:$0xff]
  %v31 = vld [vmem:[%s1 + $0x80] sm:$0xff]
  %v32 = vld [vmem:[%s1 + $0x88] sm:$0xff]
  %v33 = vld [vmem:[%s1 + $0x90] sm:$0xff]
  %v34 = vld [vmem:[%s1 + $0x98] sm:$0xff]
  %v35 = vld [vmem:[%s1 + $0xa0] sm:$0xff]
  %v36 = vld [vmem:[%s1 + $0xa8] sm:$0xff]
  %v37 = vld [vmem:[%s1 + $0xb0] sm:$0xff]
  %v38 = vld [vmem:[%s1 + $0xb8] sm:$0xff]
  %v39 = vld [vmem:[%s1 + $0xc0] sm:$0xff]
  %v40 = vld [vmem:[%s1 + $0xc8] sm:$0xff]
  %v41 = vld [vmem:[%s2] sm:$0xff]
  %43 = vset.pattern.permute.xlu0 0
  %44 = vperm.xlu0 %43, %v41
  %v45 = vpop.permute.xlu0 %44
  %vm47 = vcmask 130048
  %v49 = vsel %vm47, %v14, 0
  %51 = vmatprep.subr.mxu0 %v16
  %52 = vmatpush1.msra.mxu0 %v15
  %53 = vmatprep.subr.mxu0 %v29
  %54 = vmatpush1.msra.mxu0 %v28
  %55 = vmatprep.subr.mxu0 0.0
  %56 = vmatpush1.msra.mxu0 0.0
  %57 = vmatprep.subr.mxu0 0.0
  %58 = vmatpush1.msra.mxu0 0.0
  %59 = vmatprep.subr.mxu0 0.0
  %60 = vmatpush1.msra.mxu0 0.0
  %61 = vmatprep.subr.mxu0 0.0
  %62 = vmatpush1.msra.mxu0 0.0
  %63 = vmatprep.subr.mxu0 0.0
  %64 = vmatpush1.msra.mxu0 0.0
  %65 = vmatprep.subr.mxu0 0.0
  %66 = vmatpush1.msra.mxu0 0.0
  %67 = vmatprep.subr.mxu0 0.0
  %68 = vmatpush1.msra.mxu0 0.0
  %69 = vmatprep.subr.mxu0 0.0
  %70 = vmatpush1.msra.mxu0 0.0
  %71 = vmatprep.subr.mxu0 0.0
  %72 = vmatpush1.msra.mxu0 0.0
  %73 = vmatprep.subr.mxu0 0.0
  %74 = vmatpush1.msra.mxu0 0.0
  %75 = vmatprep.subr.mxu0 0.0
  %76 = vmatpush1.msra.mxu0 0.0
  %77 = vmatprep.subr.mxu0 0.0
  %78 = vmatpush1.msra.mxu0 0.0
  %79 = vmatprep.subr.mxu0 0.0
  %80 = vmatpush1.msra.mxu0 0.0
  %81 = vmatprep.subr.mxu0 0.0
  %82 = vmatpush1.msra.mxu0 0.0
  %83 = vmatprep.subr.mxu0 0.0
  %84 = vmatpush1.msra.mxu0 0.0
  %85 = vmatprep.subr.mxu0 0.0
  %86 = vmatpush1.msra.mxu0 0.0
  %87 = vmatprep.subr.mxu0 0.0
  %88 = vmatpush1.msra.mxu0 0.0
  %89 = vmatprep.subr.mxu0 0.0
  %90 = vmatpush1.msra.mxu0 0.0
  %91 = vmatprep.subr.mxu0 0.0
  %92 = vmatpush1.msra.mxu0 0.0
  %93 = vmatprep.subr.mxu0 0.0
  %94 = vmatpush1.msra.mxu0 0.0
  %95 = vmatprep.subr.mxu0 0.0
  %96 = vmatpush1.msra.mxu0 0.0
  %97 = vmatprep.subr.mxu0 0.0
  %98 = vmatpush1.msra.mxu0 0.0
  %99 = vmatprep.subr.mxu0 0.0
  %100 = vmatpush1.msra.mxu0 0.0
  %101 = vmatprep.subr.mxu0 0.0
  %102 = vmatpush1.msra.mxu0 0.0
  %103 = vmatprep.subr.mxu0 0.0
  %104 = vmatpush1.msra.mxu0 0.0
  %105 = vmatprep.subr.mxu0 0.0
  %106 = vmatpush1.msra.mxu0 0.0
  %107 = vmatprep.subr.mxu0 0.0
  %108 = vmatpush1.msra.mxu0 0.0
  %109 = vmatprep.subr.mxu0 0.0
  %110 = vmatpush1.msra.mxu0 0.0
  %111 = vmatprep.subr.mxu0 0.0
  %112 = vmatpush1.msra.mxu0 0.0
  %113 = vmatprep.subr.mxu0 0.0
  %114 = vmatpush1.msra.mxu0 0.0
  %115 = vmatprep.mubr.f32.mxu0 0.0
  %116 = vmatmul.mubr.f32.gmra.mrb[0].mxu0 %v49
  %v117 = vpop.f32.mrb[0].mxu0
  %v118 = vadd.f32 %v45, %v117
  %v119 = vpop.f32.mrb[0].mxu0
  %v120 = vadd.f32 %v45, %v119
  %121 = vdwg.mxu0
  %122 = vmatprep.subr.mxu0 %v18
  %123 = vmatpush1.msra.mxu0 %v17
  %124 = vmatprep.subr.mxu0 %v31
  %125 = vmatpush1.msra.mxu0 %v30
  %126 = vmatprep.subr.mxu0 0.0
  %127 = vmatpush1.msra.mxu0 0.0
  %128 = vmatprep.subr.mxu0 0.0
  %129 = vmatpush1.msra.mxu0 0.0
  %130 = vmatprep.subr.mxu0 0.0
  %131 = vmatpush1.msra.mxu0 0.0
  %132 = vmatprep.subr.mxu0 0.0
  %133 = vmatpush1.msra.mxu0 0.0
  %134 = vmatprep.subr.mxu0 0.0
  %135 = vmatpush1.msra.mxu0 0.0
  %136 = vmatprep.subr.mxu0 0.0
  %137 = vmatpush1.msra.mxu0 0.0
  %138 = vmatprep.subr.mxu0 0.0
  %139 = vmatpush1.msra.mxu0 0.0
  %140 = vmatprep.subr.mxu0 0.0
  %141 = vmatpush1.msra.mxu0 0.0
  %142 = vmatprep.subr.mxu0 0.0
  %143 = vmatpush1.msra.mxu0 0.0
  %144 = vmatprep.subr.mxu0 0.0
  %145 = vmatpush1.msra.mxu0 0.0
  %146 = vmatprep.subr.mxu0 0.0
  %147 = vmatpush1.msra.mxu0 0.0
  %148 = vmatprep.subr.mxu0 0.0
  %149 = vmatpush1.msra.mxu0 0.0
  %150 = vmatprep.subr.mxu0 0.0
  %151 = vmatpush1.msra.mxu0 0.0
  %152 = vmatprep.subr.mxu0 0.0
  %153 = vmatpush1.msra.mxu0 0.0
  %154 = vmatprep.subr.mxu0 0.0
  %155 = vmatpush1.msra.mxu0 0.0
  %156 = vmatprep.subr.mxu0 0.0
  %157 = vmatpush1.msra.mxu0 0.0
  %158 = vmatprep.subr.mxu0 0.0
  %159 = vmatpush1.msra.mxu0 0.0
  %160 = vmatprep.subr.mxu0 0.0
  %161 = vmatpush1.msra.mxu0 0.0
  %162 = vmatprep.subr.mxu0 0.0
  %163 = vmatpush1.msra.mxu0 0.0
  %164 = vmatprep.subr.mxu0 0.0
  %165 = vmatpush1.msra.mxu0 0.0
  %166 = vmatprep.subr.mxu0 0.0
  %167 = vmatpush1.msra.mxu0 0.0
  %168 = vmatprep.subr.mxu0 0.0
  %169 = vmatpush1.msra.mxu0 0.0
  %170 = vmatprep.subr.mxu0 0.0
  %171 = vmatpush1.msra.mxu0 0.0
  %172 = vmatprep.subr.mxu0 0.0
  %173 = vmatpush1.msra.mxu0 0.0
  %174 = vmatprep.subr.mxu0 0.0
  %175 = vmatpush1.msra.mxu0 0.0
  %176 = vmatprep.subr.mxu0 0.0
  %177 = vmatpush1.msra.mxu0 0.0
  %178 = vmatprep.subr.mxu0 0.0
  %179 = vmatpush1.msra.mxu0 0.0
  %180 = vmatprep.subr.mxu0 0.0
  %181 = vmatpush1.msra.mxu0 0.0
  %182 = vmatprep.subr.mxu0 0.0
  %183 = vmatpush1.msra.mxu0 0.0
  %184 = vmatprep.subr.mxu0 0.0
  %185 = vmatpush1.msra.mxu0 0.0
  %186 = vmatprep.mubr.f32.mxu0 0.0
  %187 = vmatmul.mubr.f32.gmra.mrb[0].mxu0 %v49
  %v188 = vpop.f32.mrb[0].mxu0
  %v189 = vadd.f32 %v45, %v188
  %v190 = vpop.f32.mrb[0].mxu0
  %v191 = vadd.f32 %v45, %v190
  %192 = vdwg.mxu0
  %193 = vmatprep.subr.mxu0 %v20
  %194 = vmatpush1.msra.mxu0 %v19
  %195 = vmatprep.subr.mxu0 %v33
  %196 = vmatpush1.msra.mxu0 %v32
  %197 = vmatprep.subr.mxu0 0.0
  %198 = vmatpush1.msra.mxu0 0.0
  %199 = vmatprep.subr.mxu0 0.0
  %200 = vmatpush1.msra.mxu0 0.0
  %201 = vmatprep.subr.mxu0 0.0
  %202 = vmatpush1.msra.mxu0 0.0
  %203 = vmatprep.subr.mxu0 0.0
  %204 = vmatpush1.msra.mxu0 0.0
  %205 = vmatprep.subr.mxu0 0.0
  %206 = vmatpush1.msra.mxu0 0.0
  %207 = vmatprep.subr.mxu0 0.0
  %208 = vmatpush1.msra.mxu0 0.0
  %209 = vmatprep.subr.mxu0 0.0
  %210 = vmatpush1.msra.mxu0 0.0
  %211 = vmatprep.subr.mxu0 0.0
  %212 = vmatpush1.msra.mxu0 0.0
  %213 = vmatprep.subr.mxu0 0.0
  %214 = vmatpush1.msra.mxu0 0.0
  %215 = vmatprep.subr.mxu0 0.0
  %216 = vmatpush1.msra.mxu0 0.0
  %217 = vmatprep.subr.mxu0 0.0
  %218 = vmatpush1.msra.mxu0 0.0
  %219 = vmatprep.subr.mxu0 0.0
  %220 = vmatpush1.msra.mxu0 0.0
  %221 = vmatprep.subr.mxu0 0.0
  %222 = vmatpush1.msra.mxu0 0.0
  %223 = vmatprep.subr.mxu0 0.0
  %224 = vmatpush1.msra.mxu0 0.0
  %225 = vmatprep.subr.mxu0 0.0
  %226 = vmatpush1.msra.mxu0 0.0
  %227 = vmatprep.subr.mxu0 0.0
  %228 = vmatpush1.msra.mxu0 0.0
  %229 = vmatprep.subr.mxu0 0.0
  %230 = vmatpush1.msra.mxu0 0.0
  %231 = vmatprep.subr.mxu0 0.0
  %232 = vmatpush1.msra.mxu0 0.0
  %233 = vmatprep.subr.mxu0 0.0
  %234 = vmatpush1.msra.mxu0 0.0
  %235 = vmatprep.subr.mxu0 0.0
  %236 = vmatpush1.msra.mxu0 0.0
  %237 = vmatprep.subr.mxu0 0.0
  %238 = vmatpush1.msra.mxu0 0.0
  %239 = vmatprep.subr.mxu0 0.0
  %240 = vmatpush1.msra.mxu0 0.0
  %241 = vmatprep.subr.mxu0 0.0
  %242 = vmatpush1.msra.mxu0 0.0
  %243 = vmatprep.subr.mxu0 0.0
  %244 = vmatpush1.msra.mxu0 0.0
  %245 = vmatprep.subr.mxu0 0.0
  %246 = vmatpush1.msra.mxu0 0.0
  %247 = vmatprep.subr.mxu0 0.0
  %248 = vmatpush1.msra.mxu0 0.0
  %249 = vmatprep.subr.mxu0 0.0
  %250 = vmatpush1.msra.mxu0 0.0
  %251 = vmatprep.subr.mxu0 0.0
  %252 = vmatpush1.msra.mxu0 0.0
  %253 = vmatprep.subr.mxu0 0.0
  %254 = vmatpush1.msra.mxu0 0.0
  %255 = vmatprep.subr.mxu0 0.0
  %256 = vmatpush1.msra.mxu0 0.0
  %257 = vmatprep.mubr.f32.mxu0 0.0
  %258 = vmatmul.mubr.f32.gmra.mrb[0].mxu0 %v49
  %v259 = vpop.f32.mrb[0].mxu0
  %v260 = vadd.f32 %v45, %v259
  %v261 = vpop.f32.mrb[0].mxu0
  %v262 = vadd.f32 %v45, %v261
  %263 = vdwg.mxu0
  %264 = vmatprep.subr.mxu0 %v22
  %265 = vmatpush1.msra.mxu0 %v21
  %266 = vmatprep.subr.mxu0 %v35
  %267 = vmatpush1.msra.mxu0 %v34
  %268 = vmatprep.subr.mxu0 0.0
  %269 = vmatpush1.msra.mxu0 0.0
  %270 = vmatprep.subr.mxu0 0.0
  %271 = vmatpush1.msra.mxu0 0.0
  %272 = vmatprep.subr.mxu0 0.0
  %273 = vmatpush1.msra.mxu0 0.0
  %274 = vmatprep.subr.mxu0 0.0
  %275 = vmatpush1.msra.mxu0 0.0
  %276 = vmatprep.subr.mxu0 0.0
  %277 = vmatpush1.msra.mxu0 0.0
  %278 = vmatprep.subr.mxu0 0.0
  %279 = vmatpush1.msra.mxu0 0.0
  %280 = vmatprep.subr.mxu0 0.0
  %281 = vmatpush1.msra.mxu0 0.0
  %282 = vmatprep.subr.mxu0 0.0
  %283 = vmatpush1.msra.mxu0 0.0
  %284 = vmatprep.subr.mxu0 0.0
  %285 = vmatpush1.msra.mxu0 0.0
  %286 = vmatprep.subr.mxu0 0.0
  %287 = vmatpush1.msra.mxu0 0.0
  %288 = vmatprep.subr.mxu0 0.0
  %289 = vmatpush1.msra.mxu0 0.0
  %290 = vmatprep.subr.mxu0 0.0
  %291 = vmatpush1.msra.mxu0 0.0
  %292 = vmatprep.subr.mxu0 0.0
  %293 = vmatpush1.msra.mxu0 0.0
  %294 = vmatprep.subr.mxu0 0.0
  %295 = vmatpush1.msra.mxu0 0.0
  %296 = vmatprep.subr.mxu0 0.0
  %297 = vmatpush1.msra.mxu0 0.0
  %298 = vmatprep.subr.mxu0 0.0
  %299 = vmatpush1.msra.mxu0 0.0
  %300 = vmatprep.subr.mxu0 0.0
  %301 = vmatpush1.msra.mxu0 0.0
  %302 = vmatprep.subr.mxu0 0.0
  %303 = vmatpush1.msra.mxu0 0.0
  %304 = vmatprep.subr.mxu0 0.0
  %305 = vmatpush1.msra.mxu0 0.0
  %306 = vmatprep.subr.mxu0 0.0
  %307 = vmatpush1.msra.mxu0 0.0
  %308 = vmatprep.subr.mxu0 0.0
  %309 = vmatpush1.msra.mxu0 0.0
  %310 = vmatprep.subr.mxu0 0.0
  %311 = vmatpush1.msra.mxu0 0.0
  %312 = vmatprep.subr.mxu0 0.0
  %313 = vmatpush1.msra.mxu0 0.0
  %314 = vmatprep.subr.mxu0 0.0
  %315 = vmatpush1.msra.mxu0 0.0
  %316 = vmatprep.subr.mxu0 0.0
  %317 = vmatpush1.msra.mxu0 0.0
  %318 = vmatprep.subr.mxu0 0.0
  %319 = vmatpush1.msra.mxu0 0.0
  %320 = vmatprep.subr.mxu0 0.0
  %321 = vmatpush1.msra.mxu0 0.0
  %322 = vmatprep.subr.mxu0 0.0
  %323 = vmatpush1.msra.mxu0 0.0
  %324 = vmatprep.subr.mxu0 0.0
  %325 = vmatpush1.msra.mxu0 0.0
  %326 = vmatprep.subr.mxu0 0.0
  %327 = vmatpush1.msra.mxu0 0.0
  %328 = vmatprep.mubr.f32.mxu0 0.0
  %329 = vmatmul.mubr.f32.gmra.mrb[0].mxu0 %v49
  %v330 = vpop.f32.mrb[0].mxu0
  %v331 = vadd.f32 %v45, %v330
  %v332 = vpop.f32.mrb[0].mxu0
  %v333 = vadd.f32 %v45, %v332
  %334 = vdwg.mxu0
  %335 = vmatprep.subr.mxu0 %v24
  %336 = vmatpush1.msra.mxu0 %v23
  %337 = vmatprep.subr.mxu0 %v37
  %338 = vmatpush1.msra.mxu0 %v36
  %339 = vmatprep.subr.mxu0 0.0
  %340 = vmatpush1.msra.mxu0 0.0
  %341 = vmatprep.subr.mxu0 0.0
  %342 = vmatpush1.msra.mxu0 0.0
  %343 = vmatprep.subr.mxu0 0.0
  %344 = vmatpush1.msra.mxu0 0.0
  %345 = vmatprep.subr.mxu0 0.0
  %346 = vmatpush1.msra.mxu0 0.0
  %347 = vmatprep.subr.mxu0 0.0
  %348 = vmatpush1.msra.mxu0 0.0
  %349 = vmatprep.subr.mxu0 0.0
  %350 = vmatpush1.msra.mxu0 0.0
  %351 = vmatprep.subr.mxu0 0.0
  %352 = vmatpush1.msra.mxu0 0.0
  %353 = vmatprep.subr.mxu0 0.0
  %354 = vmatpush1.msra.mxu0 0.0
  %355 = vmatprep.subr.mxu0 0.0
  %356 = vmatpush1.msra.mxu0 0.0
  %357 = vmatprep.subr.mxu0 0.0
  %358 = vmatpush1.msra.mxu0 0.0
  %359 = vmatprep.subr.mxu0 0.0
  %360 = vmatpush1.msra.mxu0 0.0
  %361 = vmatprep.subr.mxu0 0.0
  %362 = vmatpush1.msra.mxu0 0.0
  %363 = vmatprep.subr.mxu0 0.0
  %364 = vmatpush1.msra.mxu0 0.0
  %365 = vmatprep.subr.mxu0 0.0
  %366 = vmatpush1.msra.mxu0 0.0
  %367 = vmatprep.subr.mxu0 0.0
  %368 = vmatpush1.msra.mxu0 0.0
  %369 = vmatprep.subr.mxu0 0.0
  %370 = vmatpush1.msra.mxu0 0.0
  %371 = vmatprep.subr.mxu0 0.0
  %372 = vmatpush1.msra.mxu0 0.0
  %373 = vmatprep.subr.mxu0 0.0
  %374 = vmatpush1.msra.mxu0 0.0
  %375 = vmatprep.subr.mxu0 0.0
  %376 = vmatpush1.msra.mxu0 0.0
  %377 = vmatprep.subr.mxu0 0.0
  %378 = vmatpush1.msra.mxu0 0.0
  %379 = vmatprep.subr.mxu0 0.0
  %380 = vmatpush1.msra.mxu0 0.0
  %381 = vmatprep.subr.mxu0 0.0
  %382 = vmatpush1.msra.mxu0 0.0
  %383 = vmatprep.subr.mxu0 0.0
  %384 = vmatpush1.msra.mxu0 0.0
  %385 = vmatprep.subr.mxu0 0.0
  %386 = vmatpush1.msra.mxu0 0.0
  %387 = vmatprep.subr.mxu0 0.0
  %388 = vmatpush1.msra.mxu0 0.0
  %389 = vmatprep.subr.mxu0 0.0
  %390 = vmatpush1.msra.mxu0 0.0
  %391 = vmatprep.subr.mxu0 0.0
  %392 = vmatpush1.msra.mxu0 0.0
  %393 = vmatprep.subr.mxu0 0.0
  %394 = vmatpush1.msra.mxu0 0.0
  %395 = vmatprep.subr.mxu0 0.0
  %396 = vmatpush1.msra.mxu0 0.0
  %397 = vmatprep.subr.mxu0 0.0
  %398 = vmatpush1.msra.mxu0 0.0
  %399 = vmatprep.mubr.f32.mxu0 0.0
  %400 = vmatmul.mubr.f32.gmra.mrb[0].mxu0 %v49
  %v401 = vpop.f32.mrb[0].mxu0
  %v402 = vadd.f32 %v45, %v401
  %v403 = vpop.f32.mrb[0].mxu0
  %v404 = vadd.f32 %v45, %v403
  %405 = vdwg.mxu0
  %406 = vmatprep.subr.mxu0 %v26
  %407 = vmatpush1.msra.mxu0 %v25
  %408 = vmatprep.subr.mxu0 %v39
  %409 = vmatpush1.msra.mxu0 %v38
  %410 = vmatprep.subr.mxu0 0.0
  %411 = vmatpush1.msra.mxu0 0.0
  %412 = vmatprep.subr.mxu0 0.0
  %413 = vmatpush1.msra.mxu0 0.0
  %414 = vmatprep.subr.mxu0 0.0
  %415 = vmatpush1.msra.mxu0 0.0
  %416 = vmatprep.subr.mxu0 0.0
  %417 = vmatpush1.msra.mxu0 0.0
  %418 = vmatprep.subr.mxu0 0.0
  %419 = vmatpush1.msra.mxu0 0.0
  %420 = vmatprep.subr.mxu0 0.0
  %421 = vmatpush1.msra.mxu0 0.0
  %422 = vmatprep.subr.mxu0 0.0
  %423 = vmatpush1.msra.mxu0 0.0
  %424 = vmatprep.subr.mxu0 0.0
  %425 = vmatpush1.msra.mxu0 0.0
  %426 = vmatprep.subr.mxu0 0.0
  %427 = vmatpush1.msra.mxu0 0.0
  %428 = vmatprep.subr.mxu0 0.0
  %429 = vmatpush1.msra.mxu0 0.0
  %430 = vmatprep.subr.mxu0 0.0
  %431 = vmatpush1.msra.mxu0 0.0
  %432 = vmatprep.subr.mxu0 0.0
  %433 = vmatpush1.msra.mxu0 0.0
  %434 = vmatprep.subr.mxu0 0.0
  %435 = vmatpush1.msra.mxu0 0.0
  %436 = vmatprep.subr.mxu0 0.0
  %437 = vmatpush1.msra.mxu0 0.0
  %438 = vmatprep.subr.mxu0 0.0
  %439 = vmatpush1.msra.mxu0 0.0
  %440 = vmatprep.subr.mxu0 0.0
  %441 = vmatpush1.msra.mxu0 0.0
  %442 = vmatprep.subr.mxu0 0.0
  %443 = vmatpush1.msra.mxu0 0.0
  %444 = vmatprep.subr.mxu0 0.0
  %445 = vmatpush1.msra.mxu0 0.0
  %446 = vmatprep.subr.mxu0 0.0
  %447 = vmatpush1.msra.mxu0 0.0
  %448 = vmatprep.subr.mxu0 0.0
  %449 = vmatpush1.msra.mxu0 0.0
  %450 = vmatprep.subr.mxu0 0.0
  %451 = vmatpush1.msra.mxu0 0.0
  %452 = vmatprep.subr.mxu0 0.0
  %453 = vmatpush1.msra.mxu0 0.0
  %454 = vmatprep.subr.mxu0 0.0
  %455 = vmatpush1.msra.mxu0 0.0
  %456 = vmatprep.subr.mxu0 0.0
  %457 = vmatpush1.msra.mxu0 0.0
  %458 = vmatprep.subr.mxu0 0.0
  %459 = vmatpush1.msra.mxu0 0.0
  %460 = vmatprep.subr.mxu0 0.0
  %461 = vmatpush1.msra.mxu0 0.0
  %462 = vmatprep.subr.mxu0 0.0
  %463 = vmatpush1.msra.mxu0 0.0
  %464 = vmatprep.subr.mxu0 0.0
  %465 = vmatpush1.msra.mxu0 0.0
  %466 = vmatprep.subr.mxu0 0.0
  %467 = vmatpush1.msra.mxu0 0.0
  %468 = vmatprep.subr.mxu0 0.0
  %469 = vmatpush1.msra.mxu0 0.0
  %470 = vmatprep.mubr.f32.mxu0 0.0
  %471 = vmatmul.mubr.f32.gmra.mrb[0].mxu0 %v49
  %v472 = vpop.f32.mrb[0].mxu0
  %v473 = vadd.f32 %v45, %v472
  %v474 = vpop.f32.mrb[0].mxu0
  %v475 = vadd.f32 %v45, %v474
  %476 = vdwg.mxu0
  %477 = vmatprep.subr.mxu0 0.0
  %478 = vmatpush1.msra.mxu0 %v27
  %479 = vmatprep.subr.mxu0 0.0
  %480 = vmatpush1.msra.mxu0 %v40
  %481 = vmatprep.subr.mxu0 0.0
  %482 = vmatpush1.msra.mxu0 0.0
  %483 = vmatprep.subr.mxu0 0.0
  %484 = vmatpush1.msra.mxu0 0.0
  %485 = vmatprep.subr.mxu0 0.0
  %486 = vmatpush1.msra.mxu0 0.0
  %487 = vmatprep.subr.mxu0 0.0
  %488 = vmatpush1.msra.mxu0 0.0
  %489 = vmatprep.subr.mxu0 0.0
  %490 = vmatpush1.msra.mxu0 0.0
  %491 = vmatprep.subr.mxu0 0.0
  %492 = vmatpush1.msra.mxu0 0.0
  %493 = vmatprep.subr.mxu0 0.0
  %494 = vmatpush1.msra.mxu0 0.0
  %495 = vmatprep.subr.mxu0 0.0
  %496 = vmatpush1.msra.mxu0 0.0
  %497 = vmatprep.subr.mxu0 0.0
  %498 = vmatpush1.msra.mxu0 0.0
  %499 = vmatprep.subr.mxu0 0.0
  %500 = vmatpush1.msra.mxu0 0.0
  %501 = vmatprep.subr.mxu0 0.0
  %502 = vmatpush1.msra.mxu0 0.0
  %503 = vmatprep.subr.mxu0 0.0
  %504 = vmatpush1.msra.mxu0 0.0
  %505 = vmatprep.subr.mxu0 0.0
  %506 = vmatpush1.msra.mxu0 0.0
  %507 = vmatprep.subr.mxu0 0.0
  %508 = vmatpush1.msra.mxu0 0.0
  %509 = vmatprep.subr.mxu0 0.0
  %510 = vmatpush1.msra.mxu0 0.0
  %511 = vmatprep.subr.mxu0 0.0
  %512 = vmatpush1.msra.mxu0 0.0
  %513 = vmatprep.subr.mxu0 0.0
  %514 = vmatpush1.msra.mxu0 0.0
  %515 = vmatprep.subr.mxu0 0.0
  %516 = vmatpush1.msra.mxu0 0.0
  %517 = vmatprep.subr.mxu0 0.0
  %518 = vmatpush1.msra.mxu0 0.0
  %519 = vmatprep.subr.mxu0 0.0
  %520 = vmatpush1.msra.mxu0 0.0
  %521 = vmatprep.subr.mxu0 0.0
  %522 = vmatpush1.msra.mxu0 0.0
  %523 = vmatprep.subr.mxu0 0.0
  %524 = vmatpush1.msra.mxu0 0.0
  %525 = vmatprep.subr.mxu0 0.0
  %526 = vmatpush1.msra.mxu0 0.0
  %527 = vmatprep.subr.mxu0 0.0
  %528 = vmatpush1.msra.mxu0 0.0
  %529 = vmatprep.subr.mxu0 0.0
  %530 = vmatpush1.msra.mxu0 0.0
  %531 = vmatprep.subr.mxu0 0.0
  %532 = vmatpush1.msra.mxu0 0.0
  %533 = vmatprep.subr.mxu0 0.0
  %534 = vmatpush1.msra.mxu0 0.0
  %535 = vmatprep.subr.mxu0 0.0
  %536 = vmatpush1.msra.mxu0 0.0
  %537 = vmatprep.subr.mxu0 0.0
  %538 = vmatpush1.msra.mxu0 0.0
  %539 = vmatprep.subr.mxu0 0.0
  %540 = vmatpush1.msra.mxu0 0.0
  %541 = vmatprep.mubr.f32.mxu0 0.0
  %542 = vmatmul.mubr.f32.gmra.mrb[0].mxu0 %v49
  %v543 = vpop.f32.mrb[0].mxu0
  %v544 = vadd.f32 %v45, %v543
  %v545 = vpop.f32.mrb[0].mxu0
  %546 = vdwg.mxu0
  %v547 = vmax.f32 %v118, 0.0
  %v548 = vmax.f32 %v120, 0.0
  %v549 = vmax.f32 %v189, 0.0
  %v550 = vmax.f32 %v191, 0.0
  %v551 = vmax.f32 %v260, 0.0
  %v552 = vmax.f32 %v262, 0.0
  %v553 = vmax.f32 %v331, 0.0
  %v554 = vmax.f32 %v333, 0.0
  %v555 = vmax.f32 %v402, 0.0
  %v556 = vmax.f32 %v404, 0.0
  %v557 = vmax.f32 %v473, 0.0
  %v558 = vmax.f32 %v475, 0.0
  %v559 = vmax.f32 %v544, 0.0
  %560 = vst [vmem:[%s3] sm:$0xff] %v547
  %561 = vst [vmem:[%s3 + $0x8] sm:$0xff] %v548
  %562 = vst [vmem:[%s3 + $0x10] sm:$0xff] %v549
  %563 = vst [vmem:[%s3 + $0x18] sm:$0xff] %v550
  %564 = vst [vmem:[%s3 + $0x20] sm:$0xff] %v551
  %565 = vst [vmem:[%s3 + $0x28] sm:$0xff] %v552
  %566 = vst [vmem:[%s3 + $0x30] sm:$0xff] %v553
  %567 = vst [vmem:[%s3 + $0x38] sm:$0xff] %v554
  %568 = vst [vmem:[%s3 + $0x40] sm:$0xff] %v555
  %569 = vst [vmem:[%s3 + $0x48] sm:$0xff] %v556
  %570 = vst [vmem:[%s3 + $0x50] sm:$0xff] %v557
  %571 = vst [vmem:[%s3 + $0x58] sm:$0xff] %v558
  %572 = vst [vmem:[%s3 + $0x60] sm:$0xff] %v559
  // Predicated region
  $region14: #{encoder_forward.4} parent=0 // pred_check
    _
  $region15: #{encoder_forward.4} parent=0 // pred_check_branch
    %574 = sbr.rel (0) target = $region17
  $region16: #{encoder_forward.4} parent=0 // pred_region
    _
  $region17: #{encoder_forward.4} parent=0 // pred_fallthru
    _
  // Predicated region
  $region18: #{encoder_forward.4} parent=0 // pred_check
    _
  $region19: #{encoder_forward.4} parent=0 // pred_check_branch
    %576 = sbr.rel (0) target = $region21
  $region20: #{encoder_forward.4} parent=0 // pred_region
    _
  $region21: #{encoder_forward.4} parent=0 // pred_fallthru
    _

// kernel: encoder_forward.5
$region0: #{encoder_forward.5}
  #allocation0 [shape = 'u32[]', space=smem, size = 0x4, offset = 0x4, fixed_abs, tag = 'smem constant byte address 0x4 - core index']
  #allocation1 [shape = 'u32[144,128]{1,0:T(1,128)}', space=vmem, size = 0x12000, scoped, tag = 'internal scratch']
  %s0 = inlined_call_operand.vmem [shape: f32[16,72], index: 0, kind: input, shape index: {}]
  %s1 = inlined_call_operand.vmem [shape: f32[72,512], index: 1, kind: input, shape index: {}]
  %s2 = inlined_call_operand.vmem [shape: f32[16,1], index: 2, kind: input, shape index: {}]
  %s3 = inlined_call_operand.vmem [shape: f32[16,1], index: 3, kind: input, shape index: {}]
  %s4 = inlined_call_operand.vmem [shape: f32[16,512], index: 4, kind: output, shape index: {}]
  %s5 = sld [smem:[#allocation0]]
  $region26: #{encoder_forward.5} parent=0
    _
  %s7 = ssub.s32 1, %s5
  %s8 = scalar_select 0, %s7, %s5
  // Predicated region
  $region2: #{encoder_forward.5} parent=0 // pred_check
    _
  $region3: #{encoder_forward.5} parent=0 // pred_check_branch
    %10 = sbr.rel (0) target = $region5
  $region4: #{encoder_forward.5} parent=0 // pred_region
    _
  $region5: #{encoder_forward.5} parent=0 // pred_fallthru
    _
  // Predicated region
  $region6: #{encoder_forward.5} parent=0 // pred_check
    _
  $region7: #{encoder_forward.5} parent=0 // pred_check_branch
    %12 = sbr.rel (0) target = $region9
  $region8: #{encoder_forward.5} parent=0 // pred_region
    _
  $region9: #{encoder_forward.5} parent=0 // pred_fallthru
    _
  // Predicated region
  $region10: #{encoder_forward.5} parent=0 // pred_check
    _
  $region11: #{encoder_forward.5} parent=0 // pred_check_branch
    %14 = sbr.rel (0) target = $region13
  $region12: #{encoder_forward.5} parent=0 // pred_region
    _
  $region13: #{encoder_forward.5} parent=0 // pred_fallthru
    _
  // Predicated region
  $region14: #{encoder_forward.5} parent=0 // pred_check
    _
  $region15: #{encoder_forward.5} parent=0 // pred_check_branch
    %16 = sbr.rel (0) target = $region17
  $region16: #{encoder_forward.5} parent=0 // pred_region
    _
  $region17: #{encoder_forward.5} parent=0 // pred_fallthru
    _
  %v17 = vld [vmem:[%s0] sm:$0xff]
  %v18 = vld [vmem:[%s0 + $0x8] sm:$0xff]
  %v19 = vld [vmem:[%s1] sm:$0xff]
  %v20 = vld [vmem:[%s1 + $0x8] sm:$0xff]
  %v21 = vld [vmem:[%s1 + $0x10] sm:$0xff]
  %v22 = vld [vmem:[%s1 + $0x18] sm:$0xff]
  %v23 = vld [vmem:[%s1 + $0x20] sm:$0xff]
  %v24 = vld [vmem:[%s1 + $0x28] sm:$0xff]
  %v25 = vld [vmem:[%s1 + $0x30] sm:$0xff]
  %v26 = vld [vmem:[%s1 + $0x38] sm:$0xff]
  %v27 = vld [vmem:[%s1 + $0x40] sm:$0xff]
  %v28 = vld [vmem:[%s1 + $0x48] sm:$0xff]
  %v29 = vld [vmem:[%s1 + $0x50] sm:$0xff]
  %v30 = vld [vmem:[%s1 + $0x58] sm:$0xff]
  %v31 = vld [vmem:[%s1 + $0x60] sm:$0xff]
  %v32 = vld [vmem:[%s1 + $0x68] sm:$0xff]
  %v33 = vld [vmem:[%s1 + $0x70] sm:$0xff]
  %v34 = vld [vmem:[%s1 + $0x78] sm:$0xff]
  %v35 = vld [vmem:[%s1 + $0x80] sm:$0xff]
  %v36 = vld [vmem:[%s1 + $0x88] sm:$0xff]
  %v37 = vld [vmem:[%s1 + $0x90] sm:$0xff]
  %v38 = vld [vmem:[%s1 + $0x98] sm:$0xff]
  %v39 = vld [vmem:[%s1 + $0xa0] sm:$0xff]
  %v40 = vld [vmem:[%s1 + $0xa8] sm:$0xff]
  %v41 = vld [vmem:[%s1 + $0xb0] sm:$0xff]
  %v42 = vld [vmem:[%s1 + $0xb8] sm:$0xff]
  %v43 = vld [vmem:[%s1 + $0xc0] sm:$0xff]
  %v44 = vld [vmem:[%s1 + $0xc8] sm:$0xff]
  %v45 = vld [vmem:[%s1 + $0xd0] sm:$0xff]
  %v46 = vld [vmem:[%s1 + $0xd8] sm:$0xff]
  %v47 = vld [vmem:[%s1 + $0xe0] sm:$0xff]
  %v48 = vld [vmem:[%s1 + $0xe8] sm:$0xff]
  %v49 = vld [vmem:[%s1 + $0xf0] sm:$0xff]
  %v50 = vld [vmem:[%s1 + $0xf8] sm:$0xff]
  %v51 = vld [vmem:[%s1 + $0x100] sm:$0xff]
  %v52 = vld [vmem:[%s1 + $0x108] sm:$0xff]
  %v53 = vld [vmem:[%s1 + $0x110] sm:$0xff]
  %v54 = vld [vmem:[%s1 + $0x118] sm:$0xff]
  %vm55 = vcmask 588800
  %v57 = vsel %vm55, %v17, 0
  %v60 = vsel %vm55, %v18, 0
  %62 = vmatprep.subr.mxu0 %v20
  %63 = vmatpush1.msra.mxu0 %v19
  %64 = vmatprep.subr.mxu0 %v24
  %65 = vmatpush1.msra.mxu0 %v23
  %66 = vmatprep.subr.mxu0 %v28
  %67 = vmatpush1.msra.mxu0 %v27
  %68 = vmatprep.subr.mxu0 %v32
  %69 = vmatpush1.msra.mxu0 %v31
  %70 = vmatprep.subr.mxu0 %v36
  %71 = vmatpush1.msra.mxu0 %v35
  %72 = vmatprep.subr.mxu0 %v40
  %73 = vmatpush1.msra.mxu0 %v39
  %74 = vmatprep.subr.mxu0 %v44
  %75 = vmatpush1.msra.mxu0 %v43
  %76 = vmatprep.subr.mxu0 %v48
  %77 = vmatpush1.msra.mxu0 %v47
  %78 = vmatprep.subr.mxu0 %v52
  %79 = vmatpush1.msra.mxu0 %v51
  %80 = vmatprep.subr.mxu0 0.0
  %81 = vmatpush1.msra.mxu0 0.0
  %82 = vmatprep.subr.mxu0 0.0
  %83 = vmatpush1.msra.mxu0 0.0
  %84 = vmatprep.subr.mxu0 0.0
  %85 = vmatpush1.msra.mxu0 0.0
  %86 = vmatprep.subr.mxu0 0.0
  %87 = vmatpush1.msra.mxu0 0.0
  %88 = vmatprep.subr.mxu0 0.0
  %89 = vmatpush1.msra.mxu0 0.0
  %90 = vmatprep.subr.mxu0 0.0
  %91 = vmatpush1.msra.mxu0 0.0
  %92 = vmatprep.subr.mxu0 0.0
  %93 = vmatpush1.msra.mxu0 0.0
  %94 = vmatprep.subr.mxu0 0.0
  %95 = vmatpush1.msra.mxu0 0.0
  %96 = vmatprep.subr.mxu0 0.0
  %97 = vmatpush1.msra.mxu0 0.0
  %98 = vmatprep.subr.mxu0 0.0
  %99 = vmatpush1.msra.mxu0 0.0
  %100 = vmatprep.subr.mxu0 0.0
  %101 = vmatpush1.msra.mxu0 0.0
  %102 = vmatprep.subr.mxu0 0.0
  %103 = vmatpush1.msra.mxu0 0.0
  %104 = vmatprep.subr.mxu0 0.0
  %105 = vmatpush1.msra.mxu0 0.0
  %106 = vmatprep.subr.mxu0 0.0
  %107 = vmatpush1.msra.mxu0 0.0
  %108 = vmatprep.subr.mxu0 0.0
  %109 = vmatpush1.msra.mxu0 0.0
  %110 = vmatprep.subr.mxu0 0.0
  %111 = vmatpush1.msra.mxu0 0.0
  %112 = vmatprep.subr.mxu0 0.0
  %113 = vmatpush1.msra.mxu0 0.0
  %114 = vmatprep.subr.mxu0 0.0
  %115 = vmatpush1.msra.mxu0 0.0
  %116 = vmatprep.subr.mxu0 0.0
  %117 = vmatpush1.msra.mxu0 0.0
  %118 = vmatprep.subr.mxu0 0.0
  %119 = vmatpush1.msra.mxu0 0.0
  %120 = vmatprep.subr.mxu0 0.0
  %121 = vmatpush1.msra.mxu0 0.0
  %122 = vmatprep.subr.mxu0 0.0
  %123 = vmatpush1.msra.mxu0 0.0
  %124 = vmatprep.subr.mxu0 0.0
  %125 = vmatpush1.msra.mxu0 0.0
  %126 = vmatprep.mubr.f32.mxu0 0.0
  %127 = vmatmul.mubr.f32.gmra.mrb[0].mxu0 %v57
  %v128 = vpop.f32.mrb[0].mxu0
  %v129 = vadd.f32 0.0, %v128
  %v130 = vpop.f32.mrb[0].mxu0
  %v131 = vadd.f32 0.0, %v130
  %132 = vmatprep.mubr.f32.mxu0 0.0
  %133 = vmatmul.mubr.f32.gmra.mrb[0].mxu0 %v60
  %v134 = vpop.f32.mrb[0].mxu0
  %v135 = vadd.f32 0.0, %v134
  %v136 = vpop.f32.mrb[0].mxu0
  %v137 = vadd.f32 0.0, %v136
  %138 = vdwg.mxu0
  %139 = vmatprep.subr.mxu0 %v22
  %140 = vmatpush1.msra.mxu0 %v21
  %141 = vmatprep.subr.mxu0 %v26
  %142 = vmatpush1.msra.mxu0 %v25
  %143 = vmatprep.subr.mxu0 %v30
  %144 = vmatpush1.msra.mxu0 %v29
  %145 = vmatprep.subr.mxu0 %v34
  %146 = vmatpush1.msra.mxu0 %v33
  %147 = vmatprep.subr.mxu0 %v38
  %148 = vmatpush1.msra.mxu0 %v37
  %149 = vmatprep.subr.mxu0 %v42
  %150 = vmatpush1.msra.mxu0 %v41
  %151 = vmatprep.subr.mxu0 %v46
  %152 = vmatpush1.msra.mxu0 %v45
  %153 = vmatprep.subr.mxu0 %v50
  %154 = vmatpush1.msra.mxu0 %v49
  %155 = vmatprep.subr.mxu0 %v54
  %156 = vmatpush1.msra.mxu0 %v53
  %157 = vmatprep.subr.mxu0 0.0
  %158 = vmatpush1.msra.mxu0 0.0
  %159 = vmatprep.subr.mxu0 0.0
  %160 = vmatpush1.msra.mxu0 0.0
  %161 = vmatprep.subr.mxu0 0.0
  %162 = vmatpush1.msra.mxu0 0.0
  %163 = vmatprep.subr.mxu0 0.0
  %164 = vmatpush1.msra.mxu0 0.0
  %165 = vmatprep.subr.mxu0 0.0
  %166 = vmatpush1.msra.mxu0 0.0
  %167 = vmatprep.subr.mxu0 0.0
  %168 = vmatpush1.msra.mxu0 0.0
  %169 = vmatprep.subr.mxu0 0.0
  %170 = vmatpush1.msra.mxu0 0.0
  %171 = vmatprep.subr.mxu0 0.0
  %172 = vmatpush1.msra.mxu0 0.0
  %173 = vmatprep.subr.mxu0 0.0
  %174 = vmatpush1.msra.mxu0 0.0
  %175 = vmatprep.subr.mxu0 0.0
  %176 = vmatpush1.msra.mxu0 0.0
  %177 = vmatprep.subr.mxu0 0.0
  %178 = vmatpush1.msra.mxu0 0.0
  %179 = vmatprep.subr.mxu0 0.0
  %180 = vmatpush1.msra.mxu0 0.0
  %181 = vmatprep.subr.mxu0 0.0
  %182 = vmatpush1.msra.mxu0 0.0
  %183 = vmatprep.subr.mxu0 0.0
  %184 = vmatpush1.msra.mxu0 0.0
  %185 = vmatprep.subr.mxu0 0.0
  %186 = vmatpush1.msra.mxu0 0.0
  %187 = vmatprep.subr.mxu0 0.0
  %188 = vmatpush1.msra.mxu0 0.0
  %189 = vmatprep.subr.mxu0 0.0
  %190 = vmatpush1.msra.mxu0 0.0
  %191 = vmatprep.subr.mxu0 0.0
  %192 = vmatpush1.msra.mxu0 0.0
  %193 = vmatprep.subr.mxu0 0.0
  %194 = vmatpush1.msra.mxu0 0.0
  %195 = vmatprep.subr.mxu0 0.0
  %196 = vmatpush1.msra.mxu0 0.0
  %197 = vmatprep.subr.mxu0 0.0
  %198 = vmatpush1.msra.mxu0 0.0
  %199 = vmatprep.subr.mxu0 0.0
  %200 = vmatpush1.msra.mxu0 0.0
  %201 = vmatprep.subr.mxu0 0.0
  %202 = vmatpush1.msra.mxu0 0.0
  %203 = vmatprep.mubr.f32.mxu0 0.0
  %204 = vmatmul.mubr.f32.gmra.mrb[0].mxu0 %v57
  %v205 = vpop.f32.mrb[0].mxu0
  %v206 = vadd.f32 0.0, %v205
  %v207 = vpop.f32.mrb[0].mxu0
  %v208 = vadd.f32 0.0, %v207
  %209 = vmatprep.mubr.f32.mxu0 0.0
  %210 = vmatmul.mubr.f32.gmra.mrb[0].mxu0 %v60
  %v211 = vpop.f32.mrb[0].mxu0
  %v212 = vadd.f32 0.0, %v211
  %v213 = vpop.f32.mrb[0].mxu0
  %v214 = vadd.f32 0.0, %v213
  %215 = vdwg.mxu0
  %v216 = vadd.f32 %v129, %v131
  %v217 = vadd.f32 %v216, %v206
  %v218 = vadd.f32 %v217, %v208
  %219 = vadd.xlane.f32.xlu0 %v218
  %v220 = vpop.xlane.xlu0 %219
  %v221 = vadd.f32 %v135, %v137
  %v222 = vadd.f32 %v221, %v212
  %v223 = vadd.f32 %v222, %v214
  %224 = vadd.xlane.f32.xlu0 %v223
  %v225 = vpop.xlane.xlu0 %224
  %v226 = vmul.f32 %v220, 0.0025510204
  %v227 = vmul.f32 %v225, 0.0025510204
  %v228 = vsub.f32 %v129, %v226
  %v229 = vsub.f32 %v131, %v226
  %v230 = vsub.f32 %v206, %v226
  %v231 = vsub.f32 %v208, %v226
  %v232 = vsub.f32 %v135, %v227
  %v233 = vsub.f32 %v137, %v227
  %v234 = vsub.f32 %v212, %v227
  %v235 = vsub.f32 %v214, %v227
  %v236 = vlaneseq
  %v237 = vand.u32 %v236, 127
  %v238 = vadd.s32 %v237, 128
  %v239 = vadd.s32 %v237, 256
  %v240 = vadd.s32 %v237, 384
  %vm241 = vcmp.lt.s32.totalorder %v237, 392
  %vm242 = vcmp.lt.s32.totalorder %v238, 392
  %vm243 = vcmp.lt.s32.totalorder %v239, 392
  %vm244 = vcmp.lt.s32.totalorder %v240, 392
  %v245 = vsel %vm241, %v228, 0.0
  %v246 = vsel %vm242, %v229, 0.0
  %v247 = vsel %vm243, %v230, 0.0
  %v248 = vsel %vm244, %v231, 0.0
  %v249 = vsel %vm241, %v232, 0.0
  %v250 = vsel %vm242, %v233, 0.0
  %v251 = vsel %vm243, %v234, 0.0
  %v252 = vsel %vm244, %v235, 0.0
  %v253 = vmul.f32 %v245, %v245
  %v254 = vmul.f32 %v246, %v246
  %v255 = vmul.f32 %v247, %v247
  %v256 = vmul.f32 %v248, %v248
  %v257 = vmul.f32 %v249, %v249
  %v258 = vmul.f32 %v250, %v250
  %v259 = vmul.f32 %v251, %v251
  %v260 = vmul.f32 %v252, %v252
  %v261 = vadd.f32 %v253, %v254
  %v262 = vadd.f32 %v261, %v255
  %v263 = vadd.f32 %v262, %v256
  %264 = vadd.xlane.f32.xlu0 %v263
  %v265 = vpop.xlane.xlu0 %264
  %v266 = vadd.f32 %v257, %v258
  %v267 = vadd.f32 %v266, %v259
  %v268 = vadd.f32 %v267, %v260
  %269 = vadd.xlane.f32.xlu0 %v268
  %v270 = vpop.xlane.xlu0 %269
  %v271 = vmul.f32 %v265, 0.0025510204
  %v272 = vmul.f32 %v270, 0.0025510204
  %v273 = vadd.f32 %v271, 1e-05
  %v274 = vadd.f32 %v272, 1e-05
  %v275 = vrsqrt.pop %v273
  %v276 = vrsqrt.pop %v274
  %v277 = vld [vmem:[%s2] sm:$0xff]
  %v278 = vld [vmem:[%s2 + $0x8] sm:$0xff]
  %v279 = vmul.f32 %v275, %v277
  %v280 = vmul.f32 %v276, %v278
  %282 = vset.pattern.permute.xlu0 0
  %283 = vperm.xlu0 %282, %v279
  %v284 = vpop.permute.xlu0 %283
  %287 = vset.pattern.permute.xlu0 0
  %288 = vperm.xlu0 %287, %v280
  %v289 = vpop.permute.xlu0 %288
  %v291 = vmul.f32 %v228, %v284
  %v292 = vmul.f32 %v229, %v284
  %v293 = vmul.f32 %v230, %v284
  %v294 = vmul.f32 %v231, %v284
  %v295 = vmul.f32 %v232, %v289
  %v296 = vmul.f32 %v233, %v289
  %v297 = vmul.f32 %v234, %v289
  %v298 = vmul.f32 %v235, %v289
  %v299 = vld [vmem:[%s3] sm:$0xff]
  %v300 = vld [vmem:[%s3 + $0x8] sm:$0xff]
  %302 = vset.pattern.permute.xlu0 0
  %303 = vperm.xlu0 %302, %v299
  %v304 = vpop.permute.xlu0 %303
  %307 = vset.pattern.permute.xlu0 0
  %308 = vperm.xlu0 %307, %v300
  %v309 = vpop.permute.xlu0 %308
  %v311 = vadd.f32 %v291, %v304
  %v312 = vadd.f32 %v292, %v304
  %v313 = vadd.f32 %v293, %v304
  %v314 = vadd.f32 %v294, %v304
  %v315 = vadd.f32 %v295, %v309
  %v316 = vadd.f32 %v296, %v309
  %v317 = vadd.f32 %v297, %v309
  %v318 = vadd.f32 %v298, %v309
  %v319 = vmax.f32 %v311, 0.0
  %v320 = vmax.f32 %v312, 0.0
  %v321 = vmax.f32 %v313, 0.0
  %v322 = vmax.f32 %v314, 0.0
  %v323 = vmax.f32 %v315, 0.0
  %v324 = vmax.f32 %v316, 0.0
  %v325 = vmax.f32 %v317, 0.0
  %v326 = vmax.f32 %v318, 0.0
  %327 = vst [vmem:[%s4] sm:$0xff] %v319
  %328 = vst [vmem:[%s4 + $0x8] sm:$0xff] %v320
  %329 = vst [vmem:[%s4 + $0x10] sm:$0xff] %v321
  %330 = vst [vmem:[%s4 + $0x18] sm:$0xff] %v322
  %331 = vst [vmem:[%s4 + $0x20] sm:$0xff] %v323
  %332 = vst [vmem:[%s4 + $0x28] sm:$0xff] %v324
  %333 = vst [vmem:[%s4 + $0x30] sm:$0xff] %v325
  %334 = vst [vmem:[%s4 + $0x38] sm:$0xff] %v326
  // Predicated region
  $region18: #{encoder_forward.5} parent=0 // pred_check
    _
  $region19: #{encoder_forward.5} parent=0 // pred_check_branch
    %336 = sbr.rel (0) target = $region21
  $region20: #{encoder_forward.5} parent=0 // pred_region
    _
  $region21: #{encoder_forward.5} parent=0 // pred_fallthru
    _
  // Predicated region
  $region22: #{encoder_forward.5} parent=0 // pred_check
    _
  $region23: #{encoder_forward.5} parent=0 // pred_check_branch
    %338 = sbr.rel (0) target = $region25
  $region24: #{encoder_forward.5} parent=0 // pred_region
    _
  $region25: #{encoder_forward.5} parent=0 // pred_fallthru
    _

// kernel: encoder_forward.6
$region0: #{encoder_forward.6}
  #allocation0 [shape = 'u32[]', space=smem, size = 0x4, offset = 0x4, fixed_abs, tag = 'smem constant byte address 0x4 - core index']
  #allocation1 [shape = 'u32[144,128]{1,0:T(1,128)}', space=vmem, size = 0x12000, scoped, tag = 'internal scratch']
  %s0 = inlined_call_operand.vmem [shape: f32[32,256], index: 0, kind: input, shape index: {}]
  %s1 = inlined_call_operand.vmem [shape: f32[256,128], index: 1, kind: input, shape index: {}]
  %s2 = inlined_call_operand.vmem [shape: f32[32,1], index: 2, kind: input, shape index: {}]
  %s3 = inlined_call_operand.vmem [shape: f32[32,1], index: 3, kind: input, shape index: {}]
  %s4 = inlined_call_operand.vmem [shape: f32[32,128], index: 4, kind: output, shape index: {}]
  %s5 = sld [smem:[#allocation0]]
  $region26: #{encoder_forward.6} parent=0
    _
  %s7 = ssub.s32 1, %s5
  %s8 = scalar_select 0, %s7, %s5
  // Predicated region
  $region2: #{encoder_forward.6} parent=0 // pred_check
    _
  $region3: #{encoder_forward.6} parent=0 // pred_check_branch
    %10 = sbr.rel (0) target = $region5
  $region4: #{encoder_forward.6} parent=0 // pred_region
    _
  $region5: #{encoder_forward.6} parent=0 // pred_fallthru
    _
  // Predicated region
  $region6: #{encoder_forward.6} parent=0 // pred_check
    _
  $region7: #{encoder_forward.6} parent=0 // pred_check_branch
    %12 = sbr.rel (0) target = $region9
  $region8: #{encoder_forward.6} parent=0 // pred_region
    _
  $region9: #{encoder_forward.6} parent=0 // pred_fallthru
    _
  // Predicated region
  $region10: #{encoder_forward.6} parent=0 // pred_check
    _
  $region11: #{encoder_forward.6} parent=0 // pred_check_branch
    %14 = sbr.rel (0) target = $region13
  $region12: #{encoder_forward.6} parent=0 // pred_region
    _
  $region13: #{encoder_forward.6} parent=0 // pred_fallthru
    _
  // Predicated region
  $region14: #{encoder_forward.6} parent=0 // pred_check
    _
  $region15: #{encoder_forward.6} parent=0 // pred_check_branch
    %16 = sbr.rel (0) target = $region17
  $region16: #{encoder_forward.6} parent=0 // pred_region
    _
  $region17: #{encoder_forward.6} parent=0 // pred_fallthru
    _
  %v17 = vld [vmem:[%s0] sm:$0xff]
  %v18 = vld [vmem:[%s0 + $0x8] sm:$0xff]
  %v19 = vld [vmem:[%s0 + $0x10] sm:$0xff]
  %v20 = vld [vmem:[%s0 + $0x18] sm:$0xff]
  %v21 = vld [vmem:[%s0 + $0x20] sm:$0xff]
  %v22 = vld [vmem:[%s0 + $0x28] sm:$0xff]
  %v23 = vld [vmem:[%s0 + $0x30] sm:$0xff]
  %v24 = vld [vmem:[%s0 + $0x38] sm:$0xff]
  %v25 = vld [vmem:[%s1] sm:$0xff]
  %v26 = vld [vmem:[%s1 + $0x8] sm:$0xff]
  %v27 = vld [vmem:[%s1 + $0x10] sm:$0xff]
  %v28 = vld [vmem:[%s1 + $0x18] sm:$0xff]
  %v29 = vld [vmem:[%s1 + $0x20] sm:$0xff]
  %v30 = vld [vmem:[%s1 + $0x28] sm:$0xff]
  %v31 = vld [vmem:[%s1 + $0x30] sm:$0xff]
  %v32 = vld [vmem:[%s1 + $0x38] sm:$0xff]
  %v33 = vld [vmem:[%s1 + $0x40] sm:$0xff]
  %v34 = vld [vmem:[%s1 + $0x48] sm:$0xff]
  %v35 = vld [vmem:[%s1 + $0x50] sm:$0xff]
  %v36 = vld [vmem:[%s1 + $0x58] sm:$0xff]
  %v37 = vld [vmem:[%s1 + $0x60] sm:$0xff]
  %v38 = vld [vmem:[%s1 + $0x68] sm:$0xff]
  %v39 = vld [vmem:[%s1 + $0x70] sm:$0xff]
  %v40 = vld [vmem:[%s1 + $0x78] sm:$0xff]
  %v41 = vld [vmem:[%s1 + $0x80] sm:$0xff]
  %v42 = vld [vmem:[%s1 + $0x88] sm:$0xff]
  %v43 = vld [vmem:[%s1 + $0x90] sm:$0xff]
  %v44 = vld [vmem:[%s1 + $0x98] sm:$0xff]
  %v45 = vld [vmem:[%s1 + $0xa0] sm:$0xff]
  %v46 = vld [vmem:[%s1 + $0xa8] sm:$0xff]
  %v47 = vld [vmem:[%s1 + $0xb0] sm:$0xff]
  %v48 = vld [vmem:[%s1 + $0xb8] sm:$0xff]
  %v49 = vld [vmem:[%s1 + $0xc0] sm:$0xff]
  %v50 = vld [vmem:[%s1 + $0xc8] sm:$0xff]
  %v51 = vld [vmem:[%s1 + $0xd0] sm:$0xff]
  %v52 = vld [vmem:[%s1 + $0xd8] sm:$0xff]
  %v53 = vld [vmem:[%s1 + $0xe0] sm:$0xff]
  %v54 = vld [vmem:[%s1 + $0xe8] sm:$0xff]
  %v55 = vld [vmem:[%s1 + $0xf0] sm:$0xff]
  %v56 = vld [vmem:[%s1 + $0xf8] sm:$0xff]
  %57 = vmatprep.subr.mxu0 0.0
  %58 = vmatpush1.msra.mxu0 %v25
  %59 = vmatprep.subr.mxu0 0.0
  %60 = vmatpush1.msra.mxu0 %v26
  %61 = vmatprep.subr.mxu0 0.0
  %62 = vmatpush1.msra.mxu0 %v27
  %63 = vmatprep.subr.mxu0 0.0
  %64 = vmatpush1.msra.mxu0 %v28
  %65 = vmatprep.subr.mxu0 0.0
  %66 = vmatpush1.msra.mxu0 %v29
  %67 = vmatprep.subr.mxu0 0.0
  %68 = vmatpush1.msra.mxu0 %v30
  %69 = vmatprep.subr.mxu0 0.0
  %70 = vmatpush1.msra.mxu0 %v31
  %71 = vmatprep.subr.mxu0 0.0
  %72 = vmatpush1.msra.mxu0 %v32
  %73 = vmatprep.subr.mxu0 0.0
  %74 = vmatpush1.msra.mxu0 %v33
  %75 = vmatprep.subr.mxu0 0.0
  %76 = vmatpush1.msra.mxu0 %v34
  %77 = vmatprep.subr.mxu0 0.0
  %78 = vmatpush1.msra.mxu0 %v35
  %79 = vmatprep.subr.mxu0 0.0
  %80 = vmatpush1.msra.mxu0 %v36
  %81 = vmatprep.subr.mxu0 0.0
  %82 = vmatpush1.msra.mxu0 %v37
  %83 = vmatprep.subr.mxu0 0.0
  %84 = vmatpush1.msra.mxu0 %v38
  %85 = vmatprep.subr.mxu0 0.0
  %86 = vmatpush1.msra.mxu0 %v39
  %87 = vmatprep.subr.mxu0 0.0
  %88 = vmatpush1.msra.mxu0 %v40
  %89 = vmatprep.subr.mxu0 0.0
  %90 = vmatpush1.msra.mxu0 %v41
  %91 = vmatprep.subr.mxu0 0.0
  %92 = vmatpush1.msra.mxu0 %v42
  %93 = vmatprep.subr.mxu0 0.0
  %94 = vmatpush1.msra.mxu0 %v43
  %95 = vmatprep.subr.mxu0 0.0
  %96 = vmatpush1.msra.mxu0 %v44
  %97 = vmatprep.subr.mxu0 0.0
  %98 = vmatpush1.msra.mxu0 %v45
  %99 = vmatprep.subr.mxu0 0.0
  %100 = vmatpush1.msra.mxu0 %v46
  %101 = vmatprep.subr.mxu0 0.0
  %102 = vmatpush1.msra.mxu0 %v47
  %103 = vmatprep.subr.mxu0 0.0
  %104 = vmatpush1.msra.mxu0 %v48
  %105 = vmatprep.subr.mxu0 0.0
  %106 = vmatpush1.msra.mxu0 %v49
  %107 = vmatprep.subr.mxu0 0.0
  %108 = vmatpush1.msra.mxu0 %v50
  %109 = vmatprep.subr.mxu0 0.0
  %110 = vmatpush1.msra.mxu0 %v51
  %111 = vmatprep.subr.mxu0 0.0
  %112 = vmatpush1.msra.mxu0 %v52
  %113 = vmatprep.subr.mxu0 0.0
  %114 = vmatpush1.msra.mxu0 %v53
  %115 = vmatprep.subr.mxu0 0.0
  %116 = vmatpush1.msra.mxu0 %v54
  %117 = vmatprep.subr.mxu0 0.0
  %118 = vmatpush1.msra.mxu0 %v55
  %119 = vmatprep.subr.mxu0 0.0
  %120 = vmatpush1.msra.mxu0 %v56
  %121 = vmatprep.mubr.f32.mxu0 %v18
  %122 = vmatmul.mubr.f32.gmra.mrb[0].mxu0 %v17
  %v123 = vpop.f32.mrb[0].mxu0
  %v124 = vadd.f32 0.0, %v123
  %v125 = vpop.f32.mrb[0].mxu0
  %126 = vmatprep.mubr.f32.mxu0 %v20
  %127 = vmatmul.mubr.f32.gmra.mrb[0].mxu0 %v19
  %v128 = vpop.f32.mrb[0].mxu0
  %v129 = vadd.f32 0.0, %v128
  %v130 = vpop.f32.mrb[0].mxu0
  %131 = vmatprep.mubr.f32.mxu0 %v22
  %132 = vmatmul.mubr.f32.gmra.mrb[0].mxu0 %v21
  %v133 = vpop.f32.mrb[0].mxu0
  %v134 = vadd.f32 0.0, %v133
  %v135 = vpop.f32.mrb[0].mxu0
  %136 = vmatprep.mubr.f32.mxu0 %v24
  %137 = vmatmul.mubr.f32.gmra.mrb[0].mxu0 %v23
  %v138 = vpop.f32.mrb[0].mxu0
  %v139 = vadd.f32 0.0, %v138
  %v140 = vpop.f32.mrb[0].mxu0
  %141 = vdwg.mxu0
  %142 = vadd.xlane.f32.xlu0 %v124
  %v143 = vpop.xlane.xlu0 %142
  %144 = vadd.xlane.f32.xlu0 %v129
  %v145 = vpop.xlane.xlu0 %144
  %146 = vadd.xlane.f32.xlu0 %v134
  %v147 = vpop.xlane.xlu0 %146
  %148 = vadd.xlane.f32.xlu0 %v139
  %v149 = vpop.xlane.xlu0 %148
  %v150 = vmul.f32 %v143, 0.010204081
  %v151 = vmul.f32 %v145, 0.010204081
  %v152 = vmul.f32 %v147, 0.010204081
  %v153 = vmul.f32 %v149, 0.010204081
  %v154 = vsub.f32 %v124, %v150
  %v155 = vsub.f32 %v129, %v151
  %v156 = vsub.f32 %v134, %v152
  %v157 = vsub.f32 %v139, %v153
  %v158 = vlaneseq
  %v159 = vand.u32 %v158, 127
  %vm160 = vcmp.lt.s32.totalorder %v159, 98
  %v161 = vsel %vm160, %v154, 0.0
  %v162 = vsel %vm160, %v155, 0.0
  %v163 = vsel %vm160, %v156, 0.0
  %v164 = vsel %vm160, %v157, 0.0
  %v165 = vmul.f32 %v161, %v161
  %v166 = vmul.f32 %v162, %v162
  %v167 = vmul.f32 %v163, %v163
  %v168 = vmul.f32 %v164, %v164
  %169 = vadd.xlane.f32.xlu0 %v165
  %v170 = vpop.xlane.xlu0 %169
  %171 = vadd.xlane.f32.xlu0 %v166
  %v172 = vpop.xlane.xlu0 %171
  %173 = vadd.xlane.f32.xlu0 %v167
  %v174 = vpop.xlane.xlu0 %173
  %175 = vadd.xlane.f32.xlu0 %v168
  %v176 = vpop.xlane.xlu0 %175
  %v177 = vmul.f32 %v170, 0.010204081
  %v178 = vmul.f32 %v172, 0.010204081
  %v179 = vmul.f32 %v174, 0.010204081
  %v180 = vmul.f32 %v176, 0.010204081
  %v181 = vadd.f32 %v177, 1e-05
  %v182 = vadd.f32 %v178, 1e-05
  %v183 = vadd.f32 %v179, 1e-05
  %v184 = vadd.f32 %v180, 1e-05
  %v185 = vrsqrt.pop %v181
  %v186 = vrsqrt.pop %v182
  %v187 = vrsqrt.pop %v183
  %v188 = vrsqrt.pop %v184
  %v189 = vld [vmem:[%s2] sm:$0xff]
  %v190 = vld [vmem:[%s2 + $0x8] sm:$0xff]
  %v191 = vld [vmem:[%s2 + $0x10] sm:$0xff]
  %v192 = vld [vmem:[%s2 + $0x18] sm:$0xff]
  %v193 = vmul.f32 %v185, %v189
  %v194 = vmul.f32 %v186, %v190
  %v195 = vmul.f32 %v187, %v191
  %v196 = vmul.f32 %v188, %v192
  %198 = vset.pattern.permute.xlu0 0
  %199 = vperm.xlu0 %198, %v193
  %v200 = vpop.permute.xlu0 %199
  %203 = vset.pattern.permute.xlu0 0
  %204 = vperm.xlu0 %203, %v194
  %v205 = vpop.permute.xlu0 %204
  %208 = vset.pattern.permute.xlu0 0
  %209 = vperm.xlu0 %208, %v195
  %v210 = vpop.permute.xlu0 %209
  %213 = vset.pattern.permute.xlu0 0
  %214 = vperm.xlu0 %213, %v196
  %v215 = vpop.permute.xlu0 %214
  %v217 = vmul.f32 %v154, %v200
  %v218 = vmul.f32 %v155, %v205
  %v219 = vmul.f32 %v156, %v210
  %v220 = vmul.f32 %v157, %v215
  %v221 = vld [vmem:[%s3] sm:$0xff]
  %v222 = vld [vmem:[%s3 + $0x8] sm:$0xff]
  %v223 = vld [vmem:[%s3 + $0x10] sm:$0xff]
  %v224 = vld [vmem:[%s3 + $0x18] sm:$0xff]
  %226 = vset.pattern.permute.xlu0 0
  %227 = vperm.xlu0 %226, %v221
  %v228 = vpop.permute.xlu0 %227
  %231 = vset.pattern.permute.xlu0 0
  %232 = vperm.xlu0 %231, %v222
  %v233 = vpop.permute.xlu0 %232
  %236 = vset.pattern.permute.xlu0 0
  %237 = vperm.xlu0 %236, %v223
  %v238 = vpop.permute.xlu0 %237
  %241 = vset.pattern.permute.xlu0 0
  %242 = vperm.xlu0 %241, %v224
  %v243 = vpop.permute.xlu0 %242
  %v245 = vadd.f32 %v217, %v228
  %v246 = vadd.f32 %v218, %v233
  %v247 = vadd.f32 %v219, %v238
  %v248 = vadd.f32 %v220, %v243
  %v249 = vmax.f32 %v245, 0.0
  %v250 = vmax.f32 %v246, 0.0
  %v251 = vmax.f32 %v247, 0.0
  %v252 = vmax.f32 %v248, 0.0
  %253 = vst [vmem:[%s4] sm:$0xff] %v249
  %254 = vst [vmem:[%s4 + $0x8] sm:$0xff] %v250
  %255 = vst [vmem:[%s4 + $0x10] sm:$0xff] %v251
  %256 = vst [vmem:[%s4 + $0x18] sm:$0xff] %v252
  // Predicated region
  $region18: #{encoder_forward.6} parent=0 // pred_check
    _
  $region19: #{encoder_forward.6} parent=0 // pred_check_branch
    %258 = sbr.rel (0) target = $region21
  $region20: #{encoder_forward.6} parent=0 // pred_region
    _
  $region21: #{encoder_forward.6} parent=0 // pred_fallthru
    _
  // Predicated region
  $region22: #{encoder_forward.6} parent=0 // pred_check
    _
  $region23: #{encoder_forward.6} parent=0 // pred_check_branch
    %260 = sbr.rel (0) target = $region25
  $region24: #{encoder_forward.6} parent=0 // pred_region
    _
  $region25: #{encoder_forward.6} parent=0 // pred_fallthru
    _

// kernel: encoder_forward.7
$region0: #{encoder_forward.7}
  #allocation0 [shape = 'u32[]', space=smem, size = 0x4, offset = 0x4, fixed_abs, tag = 'smem constant byte address 0x4 - core index']
  #allocation1 [shape = 'u32[144,128]{1,0:T(1,128)}', space=vmem, size = 0x12000, scoped, tag = 'internal scratch']
  %s0 = inlined_call_operand.vmem [shape: f32[64,288], index: 0, kind: input, shape index: {}]
  %s1 = inlined_call_operand.vmem [shape: f32[288,18], index: 1, kind: input, shape index: {}]
  %s2 = inlined_call_operand.vmem [shape: f32[64,1], index: 2, kind: input, shape index: {}]
  %s3 = inlined_call_operand.vmem [shape: f32[9,32,64], index: 3, kind: input, shape index: {}]
  %s4 = inlined_call_operand.vmem [shape: f32[32,1], index: 4, kind: input, shape index: {}]
  %s5 = inlined_call_operand.vmem [shape: f32[32,2], index: 5, kind: output, shape index: {}]
  %s6 = sld [smem:[#allocation0]]
  $region30: #{encoder_forward.7} parent=0
    _
  %s8 = ssub.s32 1, %s6
  %s9 = scalar_select 0, %s8, %s6
  // Predicated region
  $region2: #{encoder_forward.7} parent=0 // pred_check
    _
  $region3: #{encoder_forward.7} parent=0 // pred_check_branch
    %11 = sbr.rel (0) target = $region5
  $region4: #{encoder_forward.7} parent=0 // pred_region
    _
  $region5: #{encoder_forward.7} parent=0 // pred_fallthru
    _
  // Predicated region
  $region6: #{encoder_forward.7} parent=0 // pred_check
    _
  $region7: #{encoder_forward.7} parent=0 // pred_check_branch
    %13 = sbr.rel (0) target = $region9
  $region8: #{encoder_forward.7} parent=0 // pred_region
    _
  $region9: #{encoder_forward.7} parent=0 // pred_fallthru
    _
  // Predicated region
  $region10: #{encoder_forward.7} parent=0 // pred_check
    _
  $region11: #{encoder_forward.7} parent=0 // pred_check_branch
    %15 = sbr.rel (0) target = $region13
  $region12: #{encoder_forward.7} parent=0 // pred_region
    _
  $region13: #{encoder_forward.7} parent=0 // pred_fallthru
    _
  // Predicated region
  $region14: #{encoder_forward.7} parent=0 // pred_check
    _
  $region15: #{encoder_forward.7} parent=0 // pred_check_branch
    %17 = sbr.rel (0) target = $region17
  $region16: #{encoder_forward.7} parent=0 // pred_region
    _
  $region17: #{encoder_forward.7} parent=0 // pred_fallthru
    _
  // Predicated region
  $region18: #{encoder_forward.7} parent=0 // pred_check
    _
  $region19: #{encoder_forward.7} parent=0 // pred_check_branch
    %19 = sbr.rel (0) target = $region21
  $region20: #{encoder_forward.7} parent=0 // pred_region
    _
  $region21: #{encoder_forward.7} parent=0 // pred_fallthru
    _
  %v20 = vld [vmem:[%s0] sm:$0xff]
  %v21 = vld [vmem:[%s0 + $0x8] sm:$0xff]
  %v22 = vld [vmem:[%s0 + $0x10] sm:$0xff]
  %v23 = vld [vmem:[%s0 + $0x18] sm:$0xff]
  %v24 = vld [vmem:[%s0 + $0x20] sm:$0xff]
  %v25 = vld [vmem:[%s0 + $0x28] sm:$0xff]
  %v26 = vld [vmem:[%s0 + $0x30] sm:$0xff]
  %v27 = vld [vmem:[%s0 + $0x38] sm:$0xff]
  %v28 = vld [vmem:[%s0 + $0x40] sm:$0xff]
  %v29 = vld [vmem:[%s0 + $0x48] sm:$0xff]
  %v30 = vld [vmem:[%s0 + $0x50] sm:$0xff]
  %v31 = vld [vmem:[%s0 + $0x58] sm:$0xff]
  %v32 = vld [vmem:[%s0 + $0x60] sm:$0xff]
  %v33 = vld [vmem:[%s0 + $0x68] sm:$0xff]
  %v34 = vld [vmem:[%s0 + $0x70] sm:$0xff]
  %v35 = vld [vmem:[%s0 + $0x78] sm:$0xff]
  %v36 = vld [vmem:[%s0 + $0x80] sm:$0xff]
  %v37 = vld [vmem:[%s0 + $0x88] sm:$0xff]
  %v38 = vld [vmem:[%s0 + $0x90] sm:$0xff]
  %v39 = vld [vmem:[%s0 + $0x98] sm:$0xff]
  %v40 = vld [vmem:[%s0 + $0xa0] sm:$0xff]
  %v41 = vld [vmem:[%s0 + $0xa8] sm:$0xff]
  %v42 = vld [vmem:[%s0 + $0xb0] sm:$0xff]
  %v43 = vld [vmem:[%s0 + $0xb8] sm:$0xff]
  %v44 = vld [vmem:[%s1] sm:$0xff]
  %v45 = vld [vmem:[%s1 + $0x8] sm:$0xff]
  %v46 = vld [vmem:[%s1 + $0x10] sm:$0xff]
  %v47 = vld [vmem:[%s1 + $0x18] sm:$0xff]
  %v48 = vld [vmem:[%s1 + $0x20] sm:$0xff]
  %v49 = vld [vmem:[%s1 + $0x28] sm:$0xff]
  %v50 = vld [vmem:[%s1 + $0x30] sm:$0xff]
  %v51 = vld [vmem:[%s1 + $0x38] sm:$0xff]
  %v52 = vld [vmem:[%s1 + $0x40] sm:$0xff]
  %v53 = vld [vmem:[%s1 + $0x48] sm:$0xff]
  %v54 = vld [vmem:[%s1 + $0x50] sm:$0xff]
  %v55 = vld [vmem:[%s1 + $0x58] sm:$0xff]
  %v56 = vld [vmem:[%s1 + $0x60] sm:$0xff]
  %v57 = vld [vmem:[%s1 + $0x68] sm:$0xff]
  %v58 = vld [vmem:[%s1 + $0x70] sm:$0xff]
  %v59 = vld [vmem:[%s1 + $0x78] sm:$0xff]
  %v60 = vld [vmem:[%s1 + $0x80] sm:$0xff]
  %v61 = vld [vmem:[%s1 + $0x88] sm:$0xff]
  %v62 = vld [vmem:[%s1 + $0x90] sm:$0xff]
  %v63 = vld [vmem:[%s1 + $0x98] sm:$0xff]
  %v64 = vld [vmem:[%s1 + $0xa0] sm:$0xff]
  %v65 = vld [vmem:[%s1 + $0xa8] sm:$0xff]
  %v66 = vld [vmem:[%s1 + $0xb0] sm:$0xff]
  %v67 = vld [vmem:[%s1 + $0xb8] sm:$0xff]
  %v68 = vld [vmem:[%s1 + $0xc0] sm:$0xff]
  %v69 = vld [vmem:[%s1 + $0xc8] sm:$0xff]
  %v70 = vld [vmem:[%s1 + $0xd0] sm:$0xff]
  %v71 = vld [vmem:[%s1 + $0xd8] sm:$0xff]
  %v72 = vld [vmem:[%s1 + $0xe0] sm:$0xff]
  %v73 = vld [vmem:[%s1 + $0xe8] sm:$0xff]
  %v74 = vld [vmem:[%s1 + $0xf0] sm:$0xff]
  %v75 = vld [vmem:[%s1 + $0xf8] sm:$0xff]
  %v76 = vld [vmem:[%s1 + $0x100] sm:$0xff]
  %v77 = vld [vmem:[%s1 + $0x108] sm:$0xff]
  %v78 = vld [vmem:[%s1 + $0x110] sm:$0xff]
  %v79 = vld [vmem:[%s1 + $0x118] sm:$0xff]
  %v80 = vld [vmem:[%s2] sm:$0xff]
  %v81 = vld [vmem:[%s2 + $0x8] sm:$0xff]
  %v82 = vld [vmem:[%s2 + $0x10] sm:$0xff]
  %v83 = vld [vmem:[%s2 + $0x18] sm:$0xff]
  %v84 = vld [vmem:[%s2 + $0x20] sm:$0xff]
  %v85 = vld [vmem:[%s2 + $0x28] sm:$0xff]
  %v86 = vld [vmem:[%s2 + $0x30] sm:$0xff]
  %v87 = vld [vmem:[%s2 + $0x38] sm:$0xff]
  %89 = vset.pattern.permute.xlu0 0
  %90 = vperm.xlu0 %89, %v80
  %v91 = vpop.permute.xlu0 %90
  %94 = vset.pattern.permute.xlu0 0
  %95 = vperm.xlu0 %94, %v81
  %v96 = vpop.permute.xlu0 %95
  %99 = vset.pattern.permute.xlu0 0
  %100 = vperm.xlu0 %99, %v82
  %v101 = vpop.permute.xlu0 %100
  %104 = vset.pattern.permute.xlu0 0
  %105 = vperm.xlu0 %104, %v83
  %v106 = vpop.permute.xlu0 %105
  %109 = vset.pattern.permute.xlu0 0
  %110 = vperm.xlu0 %109, %v84
  %v111 = vpop.permute.xlu0 %110
  %114 = vset.pattern.permute.xlu0 0
  %115 = vperm.xlu0 %114, %v85
  %v116 = vpop.permute.xlu0 %115
  %119 = vset.pattern.permute.xlu0 0
  %120 = vperm.xlu0 %119, %v86
  %v121 = vpop.permute.xlu0 %120
  %124 = vset.pattern.permute.xlu0 0
  %125 = vperm.xlu0 %124, %v87
  %v126 = vpop.permute.xlu0 %125
  %vm128 = vcmask 261120
  %v130 = vsel %vm128, %v22, 0
  %v133 = vsel %vm128, %v25, 0
  %v136 = vsel %vm128, %v28, 0
  %v139 = vsel %vm128, %v31, 0
  %v142 = vsel %vm128, %v34, 0
  %v145 = vsel %vm128, %v37, 0
  %v148 = vsel %vm128, %v40, 0
  %v151 = vsel %vm128, %v43, 0
  %153 = vmatprep.subr.mxu0 0.0
  %154 = vmatpush1.msra.mxu0 %v44
  %155 = vmatprep.subr.mxu0 0.0
  %156 = vmatpush1.msra.mxu0 %v45
  %157 = vmatprep.subr.mxu0 0.0
  %158 = vmatpush1.msra.mxu0 %v46
  %159 = vmatprep.subr.mxu0 0.0
  %160 = vmatpush1.msra.mxu0 %v47
  %161 = vmatprep.subr.mxu0 0.0
  %162 = vmatpush1.msra.mxu0 %v48
  %163 = vmatprep.subr.mxu0 0.0
  %164 = vmatpush1.msra.mxu0 %v49
  %165 = vmatprep.subr.mxu0 0.0
  %166 = vmatpush1.msra.mxu0 %v50
  %167 = vmatprep.subr.mxu0 0.0
  %168 = vmatpush1.msra.mxu0 %v51
  %169 = vmatprep.subr.mxu0 0.0
  %170 = vmatpush1.msra.mxu0 %v52
  %171 = vmatprep.subr.mxu0 0.0
  %172 = vmatpush1.msra.mxu0 %v53
  %173 = vmatprep.subr.mxu0 0.0
  %174 = vmatpush1.msra.mxu0 %v54
  %175 = vmatprep.subr.mxu0 0.0
  %176 = vmatpush1.msra.mxu0 %v55
  %177 = vmatprep.subr.mxu0 0.0
  %178 = vmatpush1.msra.mxu0 %v56
  %179 = vmatprep.subr.mxu0 0.0
  %180 = vmatpush1.msra.mxu0 %v57
  %181 = vmatprep.subr.mxu0 0.0
  %182 = vmatpush1.msra.mxu0 %v58
  %183 = vmatprep.subr.mxu0 0.0
  %184 = vmatpush1.msra.mxu0 %v59
  %185 = vmatprep.subr.mxu0 0.0
  %186 = vmatpush1.msra.mxu0 %v60
  %187 = vmatprep.subr.mxu0 0.0
  %188 = vmatpush1.msra.mxu0 %v61
  %189 = vmatprep.subr.mxu0 0.0
  %190 = vmatpush1.msra.mxu0 %v62
  %191 = vmatprep.subr.mxu0 0.0
  %192 = vmatpush1.msra.mxu0 %v63
  %193 = vmatprep.subr.mxu0 0.0
  %194 = vmatpush1.msra.mxu0 %v64
  %195 = vmatprep.subr.mxu0 0.0
  %196 = vmatpush1.msra.mxu0 %v65
  %197 = vmatprep.subr.mxu0 0.0
  %198 = vmatpush1.msra.mxu0 %v66
  %199 = vmatprep.subr.mxu0 0.0
  %200 = vmatpush1.msra.mxu0 %v67
  %201 = vmatprep.subr.mxu0 0.0
  %202 = vmatpush1.msra.mxu0 %v68
  %203 = vmatprep.subr.mxu0 0.0
  %204 = vmatpush1.msra.mxu0 %v69
  %205 = vmatprep.subr.mxu0 0.0
  %206 = vmatpush1.msra.mxu0 %v70
  %207 = vmatprep.subr.mxu0 0.0
  %208 = vmatpush1.msra.mxu0 %v71
  %209 = vmatprep.subr.mxu0 0.0
  %210 = vmatpush1.msra.mxu0 %v72
  %211 = vmatprep.subr.mxu0 0.0
  %212 = vmatpush1.msra.mxu0 %v73
  %213 = vmatprep.subr.mxu0 0.0
  %214 = vmatpush1.msra.mxu0 %v74
  %215 = vmatprep.subr.mxu0 0.0
  %216 = vmatpush1.msra.mxu0 %v75
  %217 = vmatprep.mubr.f32.mxu0 %v21
  %218 = vmatmul.mubr.f32.gmra.mrb[0].mxu0 %v20
  %v219 = vpop.f32.mrb[0].mxu0
  %v220 = vadd.f32 %v91, %v219
  %v221 = vpop.f32.mrb[0].mxu0
  %222 = vmatprep.mubr.f32.mxu0 %v24
  %223 = vmatmul.mubr.f32.gmra.mrb[0].mxu0 %v23
  %v224 = vpop.f32.mrb[0].mxu0
  %v225 = vadd.f32 %v96, %v224
  %v226 = vpop.f32.mrb[0].mxu0
  %227 = vmatprep.mubr.f32.mxu0 %v27
  %228 = vmatmul.mubr.f32.gmra.mrb[0].mxu0 %v26
  %v229 = vpop.f32.mrb[0].mxu0
  %v230 = vadd.f32 %v101, %v229
  %v231 = vpop.f32.mrb[0].mxu0
  %232 = vmatprep.mubr.f32.mxu0 %v30
  %233 = vmatmul.mubr.f32.gmra.mrb[0].mxu0 %v29
  %v234 = vpop.f32.mrb[0].mxu0
  %v235 = vadd.f32 %v106, %v234
  %v236 = vpop.f32.mrb[0].mxu0
  %237 = vmatprep.mubr.f32.mxu0 %v33
  %238 = vmatmul.mubr.f32.gmra.mrb[0].mxu0 %v32
  %v239 = vpop.f32.mrb[0].mxu0
  %v240 = vadd.f32 %v111, %v239
  %v241 = vpop.f32.mrb[0].mxu0
  %242 = vmatprep.mubr.f32.mxu0 %v36
  %243 = vmatmul.mubr.f32.gmra.mrb[0].mxu0 %v35
  %v244 = vpop.f32.mrb[0].mxu0
  %v245 = vadd.f32 %v116, %v244
  %v246 = vpop.f32.mrb[0].mxu0
  %247 = vmatprep.mubr.f32.mxu0 %v39
  %248 = vmatmul.mubr.f32.gmra.mrb[0].mxu0 %v38
  %v249 = vpop.f32.mrb[0].mxu0
  %v250 = vadd.f32 %v121, %v249
  %v251 = vpop.f32.mrb[0].mxu0
  %252 = vmatprep.mubr.f32.mxu0 %v42
  %253 = vmatmul.mubr.f32.gmra.mrb[0].mxu0 %v41
  %v254 = vpop.f32.mrb[0].mxu0
  %v255 = vadd.f32 %v126, %v254
  %v256 = vpop.f32.mrb[0].mxu0
  %257 = vdwg.mxu0
  %258 = vmatprep.subr.mxu0 0.0
  %259 = vmatpush1.msra.mxu0 %v76
  %260 = vmatprep.subr.mxu0 0.0
  %261 = vmatpush1.msra.mxu0 %v77
  %262 = vmatprep.subr.mxu0 0.0
  %263 = vmatpush1.msra.mxu0 %v78
  %264 = vmatprep.subr.mxu0 0.0
  %265 = vmatpush1.msra.mxu0 %v79
  %266 = vmatprep.subr.mxu0 0.0
  %267 = vmatpush1.msra.mxu0 0.0
  %268 = vmatprep.subr.mxu0 0.0
  %269 = vmatpush1.msra.mxu0 0.0
  %270 = vmatprep.subr.mxu0 0.0
  %271 = vmatpush1.msra.mxu0 0.0
  %272 = vmatprep.subr.mxu0 0.0
  %273 = vmatpush1.msra.mxu0 0.0
  %274 = vmatprep.subr.mxu0 0.0
  %275 = vmatpush1.msra.mxu0 0.0
  %276 = vmatprep.subr.mxu0 0.0
  %277 = vmatpush1.msra.mxu0 0.0
  %278 = vmatprep.subr.mxu0 0.0
  %279 = vmatpush1.msra.mxu0 0.0
  %280 = vmatprep.subr.mxu0 0.0
  %281 = vmatpush1.msra.mxu0 0.0
  %282 = vmatprep.subr.mxu0 0.0
  %283 = vmatpush1.msra.mxu0 0.0
  %284 = vmatprep.subr.mxu0 0.0
  %285 = vmatpush1.msra.mxu0 0.0
  %286 = vmatprep.subr.mxu0 0.0
  %287 = vmatpush1.msra.mxu0 0.0
  %288 = vmatprep.subr.mxu0 0.0
  %289 = vmatpush1.msra.mxu0 0.0
  %290 = vmatprep.subr.mxu0 0.0
  %291 = vmatpush1.msra.mxu0 0.0
  %292 = vmatprep.subr.mxu0 0.0
  %293 = vmatpush1.msra.mxu0 0.0
  %294 = vmatprep.subr.mxu0 0.0
  %295 = vmatpush1.msra.mxu0 0.0
  %296 = vmatprep.subr.mxu0 0.0
  %297 = vmatpush1.msra.mxu0 0.0
  %298 = vmatprep.subr.mxu0 0.0
  %299 = vmatpush1.msra.mxu0 0.0
  %300 = vmatprep.subr.mxu0 0.0
  %301 = vmatpush1.msra.mxu0 0.0
  %302 = vmatprep.subr.mxu0 0.0
  %303 = vmatpush1.msra.mxu0 0.0
  %304 = vmatprep.subr.mxu0 0.0
  %305 = vmatpush1.msra.mxu0 0.0
  %306 = vmatprep.subr.mxu0 0.0
  %307 = vmatpush1.msra.mxu0 0.0
  %308 = vmatprep.subr.mxu0 0.0
  %309 = vmatpush1.msra.mxu0 0.0
  %310 = vmatprep.subr.mxu0 0.0
  %311 = vmatpush1.msra.mxu0 0.0
  %312 = vmatprep.subr.mxu0 0.0
  %313 = vmatpush1.msra.mxu0 0.0
  %314 = vmatprep.subr.mxu0 0.0
  %315 = vmatpush1.msra.mxu0 0.0
  %316 = vmatprep.subr.mxu0 0.0
  %317 = vmatpush1.msra.mxu0 0.0
  %318 = vmatprep.subr.mxu0 0.0
  %319 = vmatpush1.msra.mxu0 0.0
  %320 = vmatprep.subr.mxu0 0.0
  %321 = vmatpush1.msra.mxu0 0.0
  %322 = vmatprep.mubr.f32.mxu0 0.0
  %323 = vmatmul.mubr.f32.gmra.mrb[0].mxu0 %v130
  %v324 = vpop.f32.mrb[0].mxu0
  %v325 = vadd.f32 %v220, %v324
  %v326 = vpop.f32.mrb[0].mxu0
  %327 = vmatprep.mubr.f32.mxu0 0.0
  %328 = vmatmul.mubr.f32.gmra.mrb[0].mxu0 %v133
  %v329 = vpop.f32.mrb[0].mxu0
  %v330 = vadd.f32 %v225, %v329
  %v331 = vpop.f32.mrb[0].mxu0
  %332 = vmatprep.mubr.f32.mxu0 0.0
  %333 = vmatmul.mubr.f32.gmra.mrb[0].mxu0 %v136
  %v334 = vpop.f32.mrb[0].mxu0
  %v335 = vadd.f32 %v230, %v334
  %v336 = vpop.f32.mrb[0].mxu0
  %337 = vmatprep.mubr.f32.mxu0 0.0
  %338 = vmatmul.mubr.f32.gmra.mrb[0].mxu0 %v139
  %v339 = vpop.f32.mrb[0].mxu0
  %v340 = vadd.f32 %v235, %v339
  %v341 = vpop.f32.mrb[0].mxu0
  %342 = vmatprep.mubr.f32.mxu0 0.0
  %343 = vmatmul.mubr.f32.gmra.mrb[0].mxu0 %v142
  %v344 = vpop.f32.mrb[0].mxu0
  %v345 = vadd.f32 %v240, %v344
  %v346 = vpop.f32.mrb[0].mxu0
  %347 = vmatprep.mubr.f32.mxu0 0.0
  %348 = vmatmul.mubr.f32.gmra.mrb[0].mxu0 %v145
  %v349 = vpop.f32.mrb[0].mxu0
  %v350 = vadd.f32 %v245, %v349
  %v351 = vpop.f32.mrb[0].mxu0
  %352 = vmatprep.mubr.f32.mxu0 0.0
  %353 = vmatmul.mubr.f32.gmra.mrb[0].mxu0 %v148
  %v354 = vpop.f32.mrb[0].mxu0
  %v355 = vadd.f32 %v250, %v354
  %v356 = vpop.f32.mrb[0].mxu0
  %357 = vmatprep.mubr.f32.mxu0 0.0
  %358 = vmatmul.mubr.f32.gmra.mrb[0].mxu0 %v151
  %v359 = vpop.f32.mrb[0].mxu0
  %v360 = vadd.f32 %v255, %v359
  %v361 = vpop.f32.mrb[0].mxu0
  %362 = vdwg.mxu0
  %v363 = vmax.f32 %v325, 0.0
  %v364 = vmax.f32 %v330, 0.0
  %v365 = vmax.f32 %v335, 0.0
  %v366 = vmax.f32 %v340, 0.0
  %v367 = vmax.f32 %v345, 0.0
  %v368 = vmax.f32 %v350, 0.0
  %v369 = vmax.f32 %v355, 0.0
  %v370 = vmax.f32 %v360, 0.0
  %v371 = vld [vmem:[%s4] sm:$0xff]
  %v372 = vld [vmem:[%s4 + $0x8] sm:$0xff]
  %v373 = vld [vmem:[%s4 + $0x10] sm:$0xff]
  %v374 = vld [vmem:[%s4 + $0x18] sm:$0xff]
  %v375 = vld [vmem:[%s3] sm:$0xff]
  %v376 = vld [vmem:[%s3 + $0x8] sm:$0xff]
  %v377 = vld [vmem:[%s3 + $0x10] sm:$0xff]
  %v378 = vld [vmem:[%s3 + $0x18] sm:$0xff]
  %vm379 = vcmask 523264
  %v381 = vsel %vm379, %v375, 0
  %v384 = vsel %vm379, %v376, 0
  %v387 = vsel %vm379, %v377, 0
  %v390 = vsel %vm379, %v378, 0
  %392 = vmatprep.subr.mxu0 0.0
  %393 = vmatpush1.msra.mxu0 %v363
  %394 = vmatprep.subr.mxu0 0.0
  %395 = vmatpush1.msra.mxu0 %v364
  %396 = vmatprep.subr.mxu0 0.0
  %397 = vmatpush1.msra.mxu0 %v365
  %398 = vmatprep.subr.mxu0 0.0
  %399 = vmatpush1.msra.mxu0 %v366
  %400 = vmatprep.subr.mxu0 0.0
  %401 = vmatpush1.msra.mxu0 %v367
  %402 = vmatprep.subr.mxu0 0.0
  %403 = vmatpush1.msra.mxu0 %v368
  %404 = vmatprep.subr.mxu0 0.0
  %405 = vmatpush1.msra.mxu0 %v369
  %406 = vmatprep.subr.mxu0 0.0
  %407 = vmatpush1.msra.mxu0 %v370
  %408 = vmatprep.subr.mxu0 0.0
  %409 = vmatpush1.msra.mxu0 0.0
  %410 = vmatprep.subr.mxu0 0.0
  %411 = vmatpush1.msra.mxu0 0.0
  %412 = vmatprep.subr.mxu0 0.0
  %413 = vmatpush1.msra.mxu0 0.0
  %414 = vmatprep.subr.mxu0 0.0
  %415 = vmatpush1.msra.mxu0 0.0
  %416 = vmatprep.subr.mxu0 0.0
  %417 = vmatpush1.msra.mxu0 0.0
  %418 = vmatprep.subr.mxu0 0.0
  %419 = vmatpush1.msra.mxu0 0.0
  %420 = vmatprep.subr.mxu0 0.0
  %421 = vmatpush1.msra.mxu0 0.0
  %422 = vmatprep.subr.mxu0 0.0
  %423 = vmatpush1.msra.mxu0 0.0
  %424 = vmatprep.subr.mxu0 0.0
  %425 = vmatpush1.msra.mxu0 0.0
  %426 = vmatprep.subr.mxu0 0.0
  %427 = vmatpush1.msra.mxu0 0.0
  %428 = vmatprep.subr.mxu0 0.0
  %429 = vmatpush1.msra.mxu0 0.0
  %430 = vmatprep.subr.mxu0 0.0
  %431 = vmatpush1.msra.mxu0 0.0
  %432 = vmatprep.subr.mxu0 0.0
  %433 = vmatpush1.msra.mxu0 0.0
  %434 = vmatprep.subr.mxu0 0.0
  %435 = vmatpush1.msra.mxu0 0.0
  %436 = vmatprep.subr.mxu0 0.0
  %437 = vmatpush1.msra.mxu0 0.0
  %438 = vmatprep.subr.mxu0 0.0
  %439 = vmatpush1.msra.mxu0 0.0
  %440 = vmatprep.subr.mxu0 0.0
  %441 = vmatpush1.msra.mxu0 0.0
  %442 = vmatprep.subr.mxu0 0.0
  %443 = vmatpush1.msra.mxu0 0.0
  %444 = vmatprep.subr.mxu0 0.0
  %445 = vmatpush1.msra.mxu0 0.0
  %446 = vmatprep.subr.mxu0 0.0
  %447 = vmatpush1.msra.mxu0 0.0
  %448 = vmatprep.subr.mxu0 0.0
  %449 = vmatpush1.msra.mxu0 0.0
  %450 = vmatprep.subr.mxu0 0.0
  %451 = vmatpush1.msra.mxu0 0.0
  %452 = vmatprep.subr.mxu0 0.0
  %453 = vmatpush1.msra.mxu0 0.0
  %454 = vmatprep.subr.mxu0 0.0
  %455 = vmatpush1.msra.mxu0 0.0
  %456 = vmatprep.mubr.f32.mxu0 0.0
  %457 = vmatmul.mubr.f32.gmra.mrb[0].mxu0 %v381
  %v458 = vpop.f32.mrb[0].mxu0
  %v459 = vadd.f32 0.0, %v458
  %v460 = vpop.f32.mrb[0].mxu0
  %461 = vmatprep.mubr.f32.mxu0 0.0
  %462 = vmatmul.mubr.f32.gmra.mrb[0].mxu0 %v384
  %v463 = vpop.f32.mrb[0].mxu0
  %v464 = vadd.f32 0.0, %v463
  %v465 = vpop.f32.mrb[0].mxu0
  %466 = vmatprep.mubr.f32.mxu0 0.0
  %467 = vmatmul.mubr.f32.gmra.mrb[0].mxu0 %v387
  %v468 = vpop.f32.mrb[0].mxu0
  %v469 = vadd.f32 0.0, %v468
  %v470 = vpop.f32.mrb[0].mxu0
  %471 = vmatprep.mubr.f32.mxu0 0.0
  %472 = vmatmul.mubr.f32.gmra.mrb[0].mxu0 %v390
  %v473 = vpop.f32.mrb[0].mxu0
  %v474 = vadd.f32 0.0, %v473
  %v475 = vpop.f32.mrb[0].mxu0
  %476 = vdwg.mxu0
  %478 = vset.pattern.permute.xlu0 0
  %479 = vperm.xlu0 %478, %v371
  %v480 = vpop.permute.xlu0 %479
  %483 = vset.pattern.permute.xlu0 0
  %484 = vperm.xlu0 %483, %v372
  %v485 = vpop.permute.xlu0 %484
  %488 = vset.pattern.permute.xlu0 0
  %489 = vperm.xlu0 %488, %v373
  %v490 = vpop.permute.xlu0 %489
  %493 = vset.pattern.permute.xlu0 0
  %494 = vperm.xlu0 %493, %v374
  %v495 = vpop.permute.xlu0 %494
  %v497 = vadd.f32 %v480, %v459
  %v498 = vadd.f32 %v485, %v464
  %v499 = vadd.f32 %v490, %v469
  %v500 = vadd.f32 %v495, %v474
  %s501 = scalar_lea.vmem %s3, 32
  %v502 = vld [vmem:[%s501] sm:$0xff]
  %v503 = vld [vmem:[%s501 + $0x8] sm:$0xff]
  %v504 = vld [vmem:[%s501 + $0x10] sm:$0xff]
  %v505 = vld [vmem:[%s501 + $0x18] sm:$0xff]
  %514 = vrot.lane.b32.xlu0 %v363, 126
  %v515 = vpop.permute.xlu0 %514
  %516 = vrot.lane.b32.xlu0 %v364, 126
  %v517 = vpop.permute.xlu0 %516
  %518 = vrot.lane.b32.xlu0 %v365, 126
  %v519 = vpop.permute.xlu0 %518
  %520 = vrot.lane.b32.xlu0 %v366, 126
  %v521 = vpop.permute.xlu0 %520
  %522 = vrot.lane.b32.xlu0 %v367, 126
  %v523 = vpop.permute.xlu0 %522
  %524 = vrot.lane.b32.xlu0 %v368, 126
  %v525 = vpop.permute.xlu0 %524
  %526 = vrot.lane.b32.xlu0 %v369, 126
  %v527 = vpop.permute.xlu0 %526
  %528 = vrot.lane.b32.xlu0 %v370, 126
  %v529 = vpop.permute.xlu0 %528
  %v539 = vsel %vm379, %v502, 0
  %v542 = vsel %vm379, %v503, 0
  %v545 = vsel %vm379, %v504, 0
  %v548 = vsel %vm379, %v505, 0
  %550 = vmatprep.subr.mxu0 0.0
  %551 = vmatpush1.msra.mxu0 %v515
  %552 = vmatprep.subr.mxu0 0.0
  %553 = vmatpush1.msra.mxu0 %v517
  %554 = vmatprep.subr.mxu0 0.0
  %555 = vmatpush1.msra.mxu0 %v519
  %556 = vmatprep.subr.mxu0 0.0
  %557 = vmatpush1.msra.mxu0 %v521
  %558 = vmatprep.subr.mxu0 0.0
  %559 = vmatpush1.msra.mxu0 %v523
  %560 = vmatprep.subr.mxu0 0.0
  %561 = vmatpush1.msra.mxu0 %v525
  %562 = vmatprep.subr.mxu0 0.0
  %563 = vmatpush1.msra.mxu0 %v527
  %564 = vmatprep.subr.mxu0 0.0
  %565 = vmatpush1.msra.mxu0 %v529
  %566 = vmatprep.subr.mxu0 0.0
  %567 = vmatpush1.msra.mxu0 0.0
  %568 = vmatprep.subr.mxu0 0.0
  %569 = vmatpush1.msra.mxu0 0.0
  %570 = vmatprep.subr.mxu0 0.0
  %571 = vmatpush1.msra.mxu0 0.0
  %572 = vmatprep.subr.mxu0 0.0
  %573 = vmatpush1.msra.mxu0 0.0
  %574 = vmatprep.subr.mxu0 0.0
  %575 = vmatpush1.msra.mxu0 0.0
  %576 = vmatprep.subr.mxu0 0.0
  %577 = vmatpush1.msra.mxu0 0.0
  %578 = vmatprep.subr.mxu0 0.0
  %579 = vmatpush1.msra.mxu0 0.0
  %580 = vmatprep.subr.mxu0 0.0
  %581 = vmatpush1.msra.mxu0 0.0
  %582 = vmatprep.subr.mxu0 0.0
  %583 = vmatpush1.msra.mxu0 0.0
  %584 = vmatprep.subr.mxu0 0.0
  %585 = vmatpush1.msra.mxu0 0.0
  %586 = vmatprep.subr.mxu0 0.0
  %587 = vmatpush1.msra.mxu0 0.0
  %588 = vmatprep.subr.mxu0 0.0
  %589 = vmatpush1.msra.mxu0 0.0
  %590 = vmatprep.subr.mxu0 0.0
  %591 = vmatpush1.msra.mxu0 0.0
  %592 = vmatprep.subr.mxu0 0.0
  %593 = vmatpush1.msra.mxu0 0.0
  %594 = vmatprep.subr.mxu0 0.0
  %595 = vmatpush1.msra.mxu0 0.0
  %596 = vmatprep.subr.mxu0 0.0
  %597 = vmatpush1.msra.mxu0 0.0
  %598 = vmatprep.subr.mxu0 0.0
  %599 = vmatpush1.msra.mxu0 0.0
  %600 = vmatprep.subr.mxu0 0.0
  %601 = vmatpush1.msra.mxu0 0.0
  %602 = vmatprep.subr.mxu0 0.0
  %603 = vmatpush1.msra.mxu0 0.0
  %604 = vmatprep.subr.mxu0 0.0
  %605 = vmatpush1.msra.mxu0 0.0
  %606 = vmatprep.subr.mxu0 0.0
  %607 = vmatpush1.msra.mxu0 0.0
  %608 = vmatprep.subr.mxu0 0.0
  %609 = vmatpush1.msra.mxu0 0.0
  %610 = vmatprep.subr.mxu0 0.0
  %611 = vmatpush1.msra.mxu0 0.0
  %612 = vmatprep.subr.mxu0 0.0
  %613 = vmatpush1.msra.mxu0 0.0
  %614 = vmatprep.mubr.f32.mxu0 0.0
  %615 = vmatmul.mubr.f32.gmra.mrb[0].mxu0 %v539
  %v616 = vpop.f32.mrb[0].mxu0
  %v617 = vadd.f32 0.0, %v616
  %v618 = vpop.f32.mrb[0].mxu0
  %619 = vmatprep.mubr.f32.mxu0 0.0
  %620 = vmatmul.mubr.f32.gmra.mrb[0].mxu0 %v542
  %v621 = vpop.f32.mrb[0].mxu0
  %v622 = vadd.f32 0.0, %v621
  %v623 = vpop.f32.mrb[0].mxu0
  %624 = vmatprep.mubr.f32.mxu0 0.0
  %625 = vmatmul.mubr.f32.gmra.mrb[0].mxu0 %v545
  %v626 = vpop.f32.mrb[0].mxu0
  %v627 = vadd.f32 0.0, %v626
  %v628 = vpop.f32.mrb[0].mxu0
  %629 = vmatprep.mubr.f32.mxu0 0.0
  %630 = vmatmul.mubr.f32.gmra.mrb[0].mxu0 %v548
  %v631 = vpop.f32.mrb[0].mxu0
  %v632 = vadd.f32 0.0, %v631
  %v633 = vpop.f32.mrb[0].mxu0
  %634 = vdwg.mxu0
  %v635 = vadd.f32 %v497, %v617
  %v636 = vadd.f32 %v498, %v622
  %v637 = vadd.f32 %v499, %v627
  %v638 = vadd.f32 %v500, %v632
  %s639 = scalar_lea.vmem %s3, 64
  %v640 = vld [vmem:[%s639] sm:$0xff]
  %v641 = vld [vmem:[%s639 + $0x8] sm:$0xff]
  %v642 = vld [vmem:[%s639 + $0x10] sm:$0xff]
  %v643 = vld [vmem:[%s639 + $0x18] sm:$0xff]
  %644 = vrot.lane.b32.xlu0 %v363, 124
  %v645 = vpop.permute.xlu0 %644
  %646 = vrot.lane.b32.xlu0 %v364, 124
  %v647 = vpop.permute.xlu0 %646
  %648 = vrot.lane.b32.xlu0 %v365, 124
  %v649 = vpop.permute.xlu0 %648
  %650 = vrot.lane.b32.xlu0 %v366, 124
  %v651 = vpop.permute.xlu0 %650
  %652 = vrot.lane.b32.xlu0 %v367, 124
  %v653 = vpop.permute.xlu0 %652
  %654 = vrot.lane.b32.xlu0 %v368, 124
  %v655 = vpop.permute.xlu0 %654
  %656 = vrot.lane.b32.xlu0 %v369, 124
  %v657 = vpop.permute.xlu0 %656
  %658 = vrot.lane.b32.xlu0 %v370, 124
  %v659 = vpop.permute.xlu0 %658
  %v669 = vsel %vm379, %v640, 0
  %v672 = vsel %vm379, %v641, 0
  %v675 = vsel %vm379, %v642, 0
  %v678 = vsel %vm379, %v643, 0
  %680 = vmatprep.subr.mxu0 0.0
  %681 = vmatpush1.msra.mxu0 %v645
  %682 = vmatprep.subr.mxu0 0.0
  %683 = vmatpush1.msra.mxu0 %v647
  %684 = vmatprep.subr.mxu0 0.0
  %685 = vmatpush1.msra.mxu0 %v649
  %686 = vmatprep.subr.mxu0 0.0
  %687 = vmatpush1.msra.mxu0 %v651
  %688 = vmatprep.subr.mxu0 0.0
  %689 = vmatpush1.msra.mxu0 %v653
  %690 = vmatprep.subr.mxu0 0.0
  %691 = vmatpush1.msra.mxu0 %v655
  %692 = vmatprep.subr.mxu0 0.0
  %693 = vmatpush1.msra.mxu0 %v657
  %694 = vmatprep.subr.mxu0 0.0
  %695 = vmatpush1.msra.mxu0 %v659
  %696 = vmatprep.subr.mxu0 0.0
  %697 = vmatpush1.msra.mxu0 0.0
  %698 = vmatprep.subr.mxu0 0.0
  %699 = vmatpush1.msra.mxu0 0.0
  %700 = vmatprep.subr.mxu0 0.0
  %701 = vmatpush1.msra.mxu0 0.0
  %702 = vmatprep.subr.mxu0 0.0
  %703 = vmatpush1.msra.mxu0 0.0
  %704 = vmatprep.subr.mxu0 0.0
  %705 = vmatpush1.msra.mxu0 0.0
  %706 = vmatprep.subr.mxu0 0.0
  %707 = vmatpush1.msra.mxu0 0.0
  %708 = vmatprep.subr.mxu0 0.0
  %709 = vmatpush1.msra.mxu0 0.0
  %710 = vmatprep.subr.mxu0 0.0
  %711 = vmatpush1.msra.mxu0 0.0
  %712 = vmatprep.subr.mxu0 0.0
  %713 = vmatpush1.msra.mxu0 0.0
  %714 = vmatprep.subr.mxu0 0.0
  %715 = vmatpush1.msra.mxu0 0.0
  %716 = vmatprep.subr.mxu0 0.0
  %717 = vmatpush1.msra.mxu0 0.0
  %718 = vmatprep.subr.mxu0 0.0
  %719 = vmatpush1.msra.mxu0 0.0
  %720 = vmatprep.subr.mxu0 0.0
  %721 = vmatpush1.msra.mxu0 0.0
  %722 = vmatprep.subr.mxu0 0.0
  %723 = vmatpush1.msra.mxu0 0.0
  %724 = vmatprep.subr.mxu0 0.0
  %725 = vmatpush1.msra.mxu0 0.0
  %726 = vmatprep.subr.mxu0 0.0
  %727 = vmatpush1.msra.mxu0 0.0
  %728 = vmatprep.subr.mxu0 0.0
  %729 = vmatpush1.msra.mxu0 0.0
  %730 = vmatprep.subr.mxu0 0.0
  %731 = vmatpush1.msra.mxu0 0.0
  %732 = vmatprep.subr.mxu0 0.0
  %733 = vmatpush1.msra.mxu0 0.0
  %734 = vmatprep.subr.mxu0 0.0
  %735 = vmatpush1.msra.mxu0 0.0
  %736 = vmatprep.subr.mxu0 0.0
  %737 = vmatpush1.msra.mxu0 0.0
  %738 = vmatprep.subr.mxu0 0.0
  %739 = vmatpush1.msra.mxu0 0.0
  %740 = vmatprep.subr.mxu0 0.0
  %741 = vmatpush1.msra.mxu0 0.0
  %742 = vmatprep.subr.mxu0 0.0
  %743 = vmatpush1.msra.mxu0 0.0
  %744 = vmatprep.mubr.f32.mxu0 0.0
  %745 = vmatmul.mubr.f32.gmra.mrb[0].mxu0 %v669
  %v746 = vpop.f32.mrb[0].mxu0
  %v747 = vadd.f32 0.0, %v746
  %v748 = vpop.f32.mrb[0].mxu0
  %749 = vmatprep.mubr.f32.mxu0 0.0
  %750 = vmatmul.mubr.f32.gmra.mrb[0].mxu0 %v672
  %v751 = vpop.f32.mrb[0].mxu0
  %v752 = vadd.f32 0.0, %v751
  %v753 = vpop.f32.mrb[0].mxu0
  %754 = vmatprep.mubr.f32.mxu0 0.0
  %755 = vmatmul.mubr.f32.gmra.mrb[0].mxu0 %v675
  %v756 = vpop.f32.mrb[0].mxu0
  %v757 = vadd.f32 0.0, %v756
  %v758 = vpop.f32.mrb[0].mxu0
  %759 = vmatprep.mubr.f32.mxu0 0.0
  %760 = vmatmul.mubr.f32.gmra.mrb[0].mxu0 %v678
  %v761 = vpop.f32.mrb[0].mxu0
  %v762 = vadd.f32 0.0, %v761
  %v763 = vpop.f32.mrb[0].mxu0
  %764 = vdwg.mxu0
  %v765 = vadd.f32 %v635, %v747
  %v766 = vadd.f32 %v636, %v752
  %v767 = vadd.f32 %v637, %v757
  %v768 = vadd.f32 %v638, %v762
  %s769 = scalar_lea.vmem %s3, 96
  %v770 = vld [vmem:[%s769] sm:$0xff]
  %v771 = vld [vmem:[%s769 + $0x8] sm:$0xff]
  %v772 = vld [vmem:[%s769 + $0x10] sm:$0xff]
  %v773 = vld [vmem:[%s769 + $0x18] sm:$0xff]
  %774 = vrot.lane.b32.xlu0 %v363, 122
  %v775 = vpop.permute.xlu0 %774
  %776 = vrot.lane.b32.xlu0 %v364, 122
  %v777 = vpop.permute.xlu0 %776
  %778 = vrot.lane.b32.xlu0 %v365, 122
  %v779 = vpop.permute.xlu0 %778
  %780 = vrot.lane.b32.xlu0 %v366, 122
  %v781 = vpop.permute.xlu0 %780
  %782 = vrot.lane.b32.xlu0 %v367, 122
  %v783 = vpop.permute.xlu0 %782
  %784 = vrot.lane.b32.xlu0 %v368, 122
  %v785 = vpop.permute.xlu0 %784
  %786 = vrot.lane.b32.xlu0 %v369, 122
  %v787 = vpop.permute.xlu0 %786
  %788 = vrot.lane.b32.xlu0 %v370, 122
  %v789 = vpop.permute.xlu0 %788
  %v799 = vsel %vm379, %v770, 0
  %v802 = vsel %vm379, %v771, 0
  %v805 = vsel %vm379, %v772, 0
  %v808 = vsel %vm379, %v773, 0
  %810 = vmatprep.subr.mxu0 0.0
  %811 = vmatpush1.msra.mxu0 %v775
  %812 = vmatprep.subr.mxu0 0.0
  %813 = vmatpush1.msra.mxu0 %v777
  %814 = vmatprep.subr.mxu0 0.0
  %815 = vmatpush1.msra.mxu0 %v779
  %816 = vmatprep.subr.mxu0 0.0
  %817 = vmatpush1.msra.mxu0 %v781
  %818 = vmatprep.subr.mxu0 0.0
  %819 = vmatpush1.msra.mxu0 %v783
  %820 = vmatprep.subr.mxu0 0.0
  %821 = vmatpush1.msra.mxu0 %v785
  %822 = vmatprep.subr.mxu0 0.0
  %823 = vmatpush1.msra.mxu0 %v787
  %824 = vmatprep.subr.mxu0 0.0
  %825 = vmatpush1.msra.mxu0 %v789
  %826 = vmatprep.subr.mxu0 0.0
  %827 = vmatpush1.msra.mxu0 0.0
  %828 = vmatprep.subr.mxu0 0.0
  %829 = vmatpush1.msra.mxu0 0.0
  %830 = vmatprep.subr.mxu0 0.0
  %831 = vmatpush1.msra.mxu0 0.0
  %832 = vmatprep.subr.mxu0 0.0
  %833 = vmatpush1.msra.mxu0 0.0
  %834 = vmatprep.subr.mxu0 0.0
  %835 = vmatpush1.msra.mxu0 0.0
  %836 = vmatprep.subr.mxu0 0.0
  %837 = vmatpush1.msra.mxu0 0.0
  %838 = vmatprep.subr.mxu0 0.0
  %839 = vmatpush1.msra.mxu0 0.0
  %840 = vmatprep.subr.mxu0 0.0
  %841 = vmatpush1.msra.mxu0 0.0
  %842 = vmatprep.subr.mxu0 0.0
  %843 = vmatpush1.msra.mxu0 0.0
  %844 = vmatprep.subr.mxu0 0.0
  %845 = vmatpush1.msra.mxu0 0.0
  %846 = vmatprep.subr.mxu0 0.0
  %847 = vmatpush1.msra.mxu0 0.0
  %848 = vmatprep.subr.mxu0 0.0
  %849 = vmatpush1.msra.mxu0 0.0
  %850 = vmatprep.subr.mxu0 0.0
  %851 = vmatpush1.msra.mxu0 0.0
  %852 = vmatprep.subr.mxu0 0.0
  %853 = vmatpush1.msra.mxu0 0.0
  %854 = vmatprep.subr.mxu0 0.0
  %855 = vmatpush1.msra.mxu0 0.0
  %856 = vmatprep.subr.mxu0 0.0
  %857 = vmatpush1.msra.mxu0 0.0
  %858 = vmatprep.subr.mxu0 0.0
  %859 = vmatpush1.msra.mxu0 0.0
  %860 = vmatprep.subr.mxu0 0.0
  %861 = vmatpush1.msra.mxu0 0.0
  %862 = vmatprep.subr.mxu0 0.0
  %863 = vmatpush1.msra.mxu0 0.0
  %864 = vmatprep.subr.mxu0 0.0
  %865 = vmatpush1.msra.mxu0 0.0
  %866 = vmatprep.subr.mxu0 0.0
  %867 = vmatpush1.msra.mxu0 0.0
  %868 = vmatprep.subr.mxu0 0.0
  %869 = vmatpush1.msra.mxu0 0.0
  %870 = vmatprep.subr.mxu0 0.0
  %871 = vmatpush1.msra.mxu0 0.0
  %872 = vmatprep.subr.mxu0 0.0
  %873 = vmatpush1.msra.mxu0 0.0
  %874 = vmatprep.mubr.f32.mxu0 0.0
  %875 = vmatmul.mubr.f32.gmra.mrb[0].mxu0 %v799
  %v876 = vpop.f32.mrb[0].mxu0
  %v877 = vadd.f32 0.0, %v876
  %v878 = vpop.f32.mrb[0].mxu0
  %879 = vmatprep.mubr.f32.mxu0 0.0
  %880 = vmatmul.mubr.f32.gmra.mrb[0].mxu0 %v802
  %v881 = vpop.f32.mrb[0].mxu0
  %v882 = vadd.f32 0.0, %v881
  %v883 = vpop.f32.mrb[0].mxu0
  %884 = vmatprep.mubr.f32.mxu0 0.0
  %885 = vmatmul.mubr.f32.gmra.mrb[0].mxu0 %v805
  %v886 = vpop.f32.mrb[0].mxu0
  %v887 = vadd.f32 0.0, %v886
  %v888 = vpop.f32.mrb[0].mxu0
  %889 = vmatprep.mubr.f32.mxu0 0.0
  %890 = vmatmul.mubr.f32.gmra.mrb[0].mxu0 %v808
  %v891 = vpop.f32.mrb[0].mxu0
  %v892 = vadd.f32 0.0, %v891
  %v893 = vpop.f32.mrb[0].mxu0
  %894 = vdwg.mxu0
  %v895 = vadd.f32 %v765, %v877
  %v896 = vadd.f32 %v766, %v882
  %v897 = vadd.f32 %v767, %v887
  %v898 = vadd.f32 %v768, %v892
  %s899 = scalar_lea.vmem %s3, 128
  %v900 = vld [vmem:[%s899] sm:$0xff]
  %v901 = vld [vmem:[%s899 + $0x8] sm:$0xff]
  %v902 = vld [vmem:[%s899 + $0x10] sm:$0xff]
  %v903 = vld [vmem:[%s899 + $0x18] sm:$0xff]
  %904 = vrot.lane.b32.xlu0 %v363, 120
  %v905 = vpop.permute.xlu0 %904
  %906 = vrot.lane.b32.xlu0 %v364, 120
  %v907 = vpop.permute.xlu0 %906
  %908 = vrot.lane.b32.xlu0 %v365, 120
  %v909 = vpop.permute.xlu0 %908
  %910 = vrot.lane.b32.xlu0 %v366, 120
  %v911 = vpop.permute.xlu0 %910
  %912 = vrot.lane.b32.xlu0 %v367, 120
  %v913 = vpop.permute.xlu0 %912
  %914 = vrot.lane.b32.xlu0 %v368, 120
  %v915 = vpop.permute.xlu0 %914
  %916 = vrot.lane.b32.xlu0 %v369, 120
  %v917 = vpop.permute.xlu0 %916
  %918 = vrot.lane.b32.xlu0 %v370, 120
  %v919 = vpop.permute.xlu0 %918
  %v929 = vsel %vm379, %v900, 0
  %v932 = vsel %vm379, %v901, 0
  %v935 = vsel %vm379, %v902, 0
  %v938 = vsel %vm379, %v903, 0
  %940 = vmatprep.subr.mxu0 0.0
  %941 = vmatpush1.msra.mxu0 %v905
  %942 = vmatprep.subr.mxu0 0.0
  %943 = vmatpush1.msra.mxu0 %v907
  %944 = vmatprep.subr.mxu0 0.0
  %945 = vmatpush1.msra.mxu0 %v909
  %946 = vmatprep.subr.mxu0 0.0
  %947 = vmatpush1.msra.mxu0 %v911
  %948 = vmatprep.subr.mxu0 0.0
  %949 = vmatpush1.msra.mxu0 %v913
  %950 = vmatprep.subr.mxu0 0.0
  %951 = vmatpush1.msra.mxu0 %v915
  %952 = vmatprep.subr.mxu0 0.0
  %953 = vmatpush1.msra.mxu0 %v917
  %954 = vmatprep.subr.mxu0 0.0
  %955 = vmatpush1.msra.mxu0 %v919
  %956 = vmatprep.subr.mxu0 0.0
  %957 = vmatpush1.msra.mxu0 0.0
  %958 = vmatprep.subr.mxu0 0.0
  %959 = vmatpush1.msra.mxu0 0.0
  %960 = vmatprep.subr.mxu0 0.0
  %961 = vmatpush1.msra.mxu0 0.0
  %962 = vmatprep.subr.mxu0 0.0
  %963 = vmatpush1.msra.mxu0 0.0
  %964 = vmatprep.subr.mxu0 0.0
  %965 = vmatpush1.msra.mxu0 0.0
  %966 = vmatprep.subr.mxu0 0.0
  %967 = vmatpush1.msra.mxu0 0.0
  %968 = vmatprep.subr.mxu0 0.0
  %969 = vmatpush1.msra.mxu0 0.0
  %970 = vmatprep.subr.mxu0 0.0
  %971 = vmatpush1.msra.mxu0 0.0
  %972 = vmatprep.subr.mxu0 0.0
  %973 = vmatpush1.msra.mxu0 0.0
  %974 = vmatprep.subr.mxu0 0.0
  %975 = vmatpush1.msra.mxu0 0.0
  %976 = vmatprep.subr.mxu0 0.0
  %977 = vmatpush1.msra.mxu0 0.0
  %978 = vmatprep.subr.mxu0 0.0
  %979 = vmatpush1.msra.mxu0 0.0
  %980 = vmatprep.subr.mxu0 0.0
  %981 = vmatpush1.msra.mxu0 0.0
  %982 = vmatprep.subr.mxu0 0.0
  %983 = vmatpush1.msra.mxu0 0.0
  %984 = vmatprep.subr.mxu0 0.0
  %985 = vmatpush1.msra.mxu0 0.0
  %986 = vmatprep.subr.mxu0 0.0
  %987 = vmatpush1.msra.mxu0 0.0
  %988 = vmatprep.subr.mxu0 0.0
  %989 = vmatpush1.msra.mxu0 0.0
  %990 = vmatprep.subr.mxu0 0.0
  %991 = vmatpush1.msra.mxu0 0.0
  %992 = vmatprep.subr.mxu0 0.0
  %993 = vmatpush1.msra.mxu0 0.0
  %994 = vmatprep.subr.mxu0 0.0
  %995 = vmatpush1.msra.mxu0 0.0
  %996 = vmatprep.subr.mxu0 0.0
  %997 = vmatpush1.msra.mxu0 0.0
  %998 = vmatprep.subr.mxu0 0.0
  %999 = vmatpush1.msra.mxu0 0.0
  %1000 = vmatprep.subr.mxu0 0.0
  %1001 = vmatpush1.msra.mxu0 0.0
  %1002 = vmatprep.subr.mxu0 0.0
  %1003 = vmatpush1.msra.mxu0 0.0
  %1004 = vmatprep.mubr.f32.mxu0 0.0
  %1005 = vmatmul.mubr.f32.gmra.mrb[0].mxu0 %v929
  %v1006 = vpop.f32.mrb[0].mxu0
  %v1007 = vadd.f32 0.0, %v1006
  %v1008 = vpop.f32.mrb[0].mxu0
  %1009 = vmatprep.mubr.f32.mxu0 0.0
  %1010 = vmatmul.mubr.f32.gmra.mrb[0].mxu0 %v932
  %v1011 = vpop.f32.mrb[0].mxu0
  %v1012 = vadd.f32 0.0, %v1011
  %v1013 = vpop.f32.mrb[0].mxu0
  %1014 = vmatprep.mubr.f32.mxu0 0.0
  %1015 = vmatmul.mubr.f32.gmra.mrb[0].mxu0 %v935
  %v1016 = vpop.f32.mrb[0].mxu0
  %v1017 = vadd.f32 0.0, %v1016
  %v1018 = vpop.f32.mrb[0].mxu0
  %1019 = vmatprep.mubr.f32.mxu0 0.0
  %1020 = vmatmul.mubr.f32.gmra.mrb[0].mxu0 %v938
  %v1021 = vpop.f32.mrb[0].mxu0
  %v1022 = vadd.f32 0.0, %v1021
  %v1023 = vpop.f32.mrb[0].mxu0
  %1024 = vdwg.mxu0
  %v1025 = vadd.f32 %v895, %v1007
  %v1026 = vadd.f32 %v896, %v1012
  %v1027 = vadd.f32 %v897, %v1017
  %v1028 = vadd.f32 %v898, %v1022
  %s1029 = scalar_lea.vmem %s3, 160
  %v1030 = vld [vmem:[%s1029] sm:$0xff]
  %v1031 = vld [vmem:[%s1029 + $0x8] sm:$0xff]
  %v1032 = vld [vmem:[%s1029 + $0x10] sm:$0xff]
  %v1033 = vld [vmem:[%s1029 + $0x18] sm:$0xff]
  %1034 = vrot.lane.b32.xlu0 %v363, 118
  %v1035 = vpop.permute.xlu0 %1034
  %1036 = vrot.lane.b32.xlu0 %v364, 118
  %v1037 = vpop.permute.xlu0 %1036
  %1038 = vrot.lane.b32.xlu0 %v365, 118
  %v1039 = vpop.permute.xlu0 %1038
  %1040 = vrot.lane.b32.xlu0 %v366, 118
  %v1041 = vpop.permute.xlu0 %1040
  %1042 = vrot.lane.b32.xlu0 %v367, 118
  %v1043 = vpop.permute.xlu0 %1042
  %1044 = vrot.lane.b32.xlu0 %v368, 118
  %v1045 = vpop.permute.xlu0 %1044
  %1046 = vrot.lane.b32.xlu0 %v369, 118
  %v1047 = vpop.permute.xlu0 %1046
  %1048 = vrot.lane.b32.xlu0 %v370, 118
  %v1049 = vpop.permute.xlu0 %1048
  %v1059 = vsel %vm379, %v1030, 0
  %v1062 = vsel %vm379, %v1031, 0
  %v1065 = vsel %vm379, %v1032, 0
  %v1068 = vsel %vm379, %v1033, 0
  %1070 = vmatprep.subr.mxu0 0.0
  %1071 = vmatpush1.msra.mxu0 %v1035
  %1072 = vmatprep.subr.mxu0 0.0
  %1073 = vmatpush1.msra.mxu0 %v1037
  %1074 = vmatprep.subr.mxu0 0.0
  %1075 = vmatpush1.msra.mxu0 %v1039
  %1076 = vmatprep.subr.mxu0 0.0
  %1077 = vmatpush1.msra.mxu0 %v1041
  %1078 = vmatprep.subr.mxu0 0.0
  %1079 = vmatpush1.msra.mxu0 %v1043
  %1080 = vmatprep.subr.mxu0 0.0
  %1081 = vmatpush1.msra.mxu0 %v1045
  %1082 = vmatprep.subr.mxu0 0.0
  %1083 = vmatpush1.msra.mxu0 %v1047
  %1084 = vmatprep.subr.mxu0 0.0
  %1085 = vmatpush1.msra.mxu0 %v1049
  %1086 = vmatprep.subr.mxu0 0.0
  %1087 = vmatpush1.msra.mxu0 0.0
  %1088 = vmatprep.subr.mxu0 0.0
  %1089 = vmatpush1.msra.mxu0 0.0
  %1090 = vmatprep.subr.mxu0 0.0
  %1091 = vmatpush1.msra.mxu0 0.0
  %1092 = vmatprep.subr.mxu0 0.0
  %1093 = vmatpush1.msra.mxu0 0.0
  %1094 = vmatprep.subr.mxu0 0.0
  %1095 = vmatpush1.msra.mxu0 0.0
  %1096 = vmatprep.subr.mxu0 0.0
  %1097 = vmatpush1.msra.mxu0 0.0
  %1098 = vmatprep.subr.mxu0 0.0
  %1099 = vmatpush1.msra.mxu0 0.0
  %1100 = vmatprep.subr.mxu0 0.0
  %1101 = vmatpush1.msra.mxu0 0.0
  %1102 = vmatprep.subr.mxu0 0.0
  %1103 = vmatpush1.msra.mxu0 0.0
  %1104 = vmatprep.subr.mxu0 0.0
  %1105 = vmatpush1.msra.mxu0 0.0
  %1106 = vmatprep.subr.mxu0 0.0
  %1107 = vmatpush1.msra.mxu0 0.0
  %1108 = vmatprep.subr.mxu0 0.0
  %1109 = vmatpush1.msra.mxu0 0.0
  %1110 = vmatprep.subr.mxu0 0.0
  %1111 = vmatpush1.msra.mxu0 0.0
  %1112 = vmatprep.subr.mxu0 0.0
  %1113 = vmatpush1.msra.mxu0 0.0
  %1114 = vmatprep.subr.mxu0 0.0
  %1115 = vmatpush1.msra.mxu0 0.0
  %1116 = vmatprep.subr.mxu0 0.0
  %1117 = vmatpush1.msra.mxu0 0.0
  %1118 = vmatprep.subr.mxu0 0.0
  %1119 = vmatpush1.msra.mxu0 0.0
  %1120 = vmatprep.subr.mxu0 0.0
  %1121 = vmatpush1.msra.mxu0 0.0
  %1122 = vmatprep.subr.mxu0 0.0
  %1123 = vmatpush1.msra.mxu0 0.0
  %1124 = vmatprep.subr.mxu0 0.0
  %1125 = vmatpush1.msra.mxu0 0.0
  %1126 = vmatprep.subr.mxu0 0.0
  %1127 = vmatpush1.msra.mxu0 0.0
  %1128 = vmatprep.subr.mxu0 0.0
  %1129 = vmatpush1.msra.mxu0 0.0
  %1130 = vmatprep.subr.mxu0 0.0
  %1131 = vmatpush1.msra.mxu0 0.0
  %1132 = vmatprep.subr.mxu0 0.0
  %1133 = vmatpush1.msra.mxu0 0.0
  %1134 = vmatprep.mubr.f32.mxu0 0.0
  %1135 = vmatmul.mubr.f32.gmra.mrb[0].mxu0 %v1059
  %v1136 = vpop.f32.mrb[0].mxu0
  %v1137 = vadd.f32 0.0, %v1136
  %v1138 = vpop.f32.mrb[0].mxu0
  %1139 = vmatprep.mubr.f32.mxu0 0.0
  %1140 = vmatmul.mubr.f32.gmra.mrb[0].mxu0 %v1062
  %v1141 = vpop.f32.mrb[0].mxu0
  %v1142 = vadd.f32 0.0, %v1141
  %v1143 = vpop.f32.mrb[0].mxu0
  %1144 = vmatprep.mubr.f32.mxu0 0.0
  %1145 = vmatmul.mubr.f32.gmra.mrb[0].mxu0 %v1065
  %v1146 = vpop.f32.mrb[0].mxu0
  %v1147 = vadd.f32 0.0, %v1146
  %v1148 = vpop.f32.mrb[0].mxu0
  %1149 = vmatprep.mubr.f32.mxu0 0.0
  %1150 = vmatmul.mubr.f32.gmra.mrb[0].mxu0 %v1068
  %v1151 = vpop.f32.mrb[0].mxu0
  %v1152 = vadd.f32 0.0, %v1151
  %v1153 = vpop.f32.mrb[0].mxu0
  %1154 = vdwg.mxu0
  %v1155 = vadd.f32 %v1025, %v1137
  %v1156 = vadd.f32 %v1026, %v1142
  %v1157 = vadd.f32 %v1027, %v1147
  %v1158 = vadd.f32 %v1028, %v1152
  %s1159 = scalar_lea.vmem %s3, 192
  %v1160 = vld [vmem:[%s1159] sm:$0xff]
  %v1161 = vld [vmem:[%s1159 + $0x8] sm:$0xff]
  %v1162 = vld [vmem:[%s1159 + $0x10] sm:$0xff]
  %v1163 = vld [vmem:[%s1159 + $0x18] sm:$0xff]
  %1164 = vrot.lane.b32.xlu0 %v363, 116
  %v1165 = vpop.permute.xlu0 %1164
  %1166 = vrot.lane.b32.xlu0 %v364, 116
  %v1167 = vpop.permute.xlu0 %1166
  %1168 = vrot.lane.b32.xlu0 %v365, 116
  %v1169 = vpop.permute.xlu0 %1168
  %1170 = vrot.lane.b32.xlu0 %v366, 116
  %v1171 = vpop.permute.xlu0 %1170
  %1172 = vrot.lane.b32.xlu0 %v367, 116
  %v1173 = vpop.permute.xlu0 %1172
  %1174 = vrot.lane.b32.xlu0 %v368, 116
  %v1175 = vpop.permute.xlu0 %1174
  %1176 = vrot.lane.b32.xlu0 %v369, 116
  %v1177 = vpop.permute.xlu0 %1176
  %1178 = vrot.lane.b32.xlu0 %v370, 116
  %v1179 = vpop.permute.xlu0 %1178
  %v1189 = vsel %vm379, %v1160, 0
  %v1192 = vsel %vm379, %v1161, 0
  %v1195 = vsel %vm379, %v1162, 0
  %v1198 = vsel %vm379, %v1163, 0
  %1200 = vmatprep.subr.mxu0 0.0
  %1201 = vmatpush1.msra.mxu0 %v1165
  %1202 = vmatprep.subr.mxu0 0.0
  %1203 = vmatpush1.msra.mxu0 %v1167
  %1204 = vmatprep.subr.mxu0 0.0
  %1205 = vmatpush1.msra.mxu0 %v1169
  %1206 = vmatprep.subr.mxu0 0.0
  %1207 = vmatpush1.msra.mxu0 %v1171
  %1208 = vmatprep.subr.mxu0 0.0
  %1209 = vmatpush1.msra.mxu0 %v1173
  %1210 = vmatprep.subr.mxu0 0.0
  %1211 = vmatpush1.msra.mxu0 %v1175
  %1212 = vmatprep.subr.mxu0 0.0
  %1213 = vmatpush1.msra.mxu0 %v1177
  %1214 = vmatprep.subr.mxu0 0.0
  %1215 = vmatpush1.msra.mxu0 %v1179
  %1216 = vmatprep.subr.mxu0 0.0
  %1217 = vmatpush1.msra.mxu0 0.0
  %1218 = vmatprep.subr.mxu0 0.0
  %1219 = vmatpush1.msra.mxu0 0.0
  %1220 = vmatprep.subr.mxu0 0.0
  %1221 = vmatpush1.msra.mxu0 0.0
  %1222 = vmatprep.subr.mxu0 0.0
  %1223 = vmatpush1.msra.mxu0 0.0
  %1224 = vmatprep.subr.mxu0 0.0
  %1225 = vmatpush1.msra.mxu0 0.0
  %1226 = vmatprep.subr.mxu0 0.0
  %1227 = vmatpush1.msra.mxu0 0.0
  %1228 = vmatprep.subr.mxu0 0.0
  %1229 = vmatpush1.msra.mxu0 0.0
  %1230 = vmatprep.subr.mxu0 0.0
  %1231 = vmatpush1.msra.mxu0 0.0
  %1232 = vmatprep.subr.mxu0 0.0
  %1233 = vmatpush1.msra.mxu0 0.0
  %1234 = vmatprep.subr.mxu0 0.0
  %1235 = vmatpush1.msra.mxu0 0.0
  %1236 = vmatprep.subr.mxu0 0.0
  %1237 = vmatpush1.msra.mxu0 0.0
  %1238 = vmatprep.subr.mxu0 0.0
  %1239 = vmatpush1.msra.mxu0 0.0
  %1240 = vmatprep.subr.mxu0 0.0
  %1241 = vmatpush1.msra.mxu0 0.0
  %1242 = vmatprep.subr.mxu0 0.0
  %1243 = vmatpush1.msra.mxu0 0.0
  %1244 = vmatprep.subr.mxu0 0.0
  %1245 = vmatpush1.msra.mxu0 0.0
  %1246 = vmatprep.subr.mxu0 0.0
  %1247 = vmatpush1.msra.mxu0 0.0
  %1248 = vmatprep.subr.mxu0 0.0
  %1249 = vmatpush1.msra.mxu0 0.0
  %1250 = vmatprep.subr.mxu0 0.0
  %1251 = vmatpush1.msra.mxu0 0.0
  %1252 = vmatprep.subr.mxu0 0.0
  %1253 = vmatpush1.msra.mxu0 0.0
  %1254 = vmatprep.subr.mxu0 0.0
  %1255 = vmatpush1.msra.mxu0 0.0
  %1256 = vmatprep.subr.mxu0 0.0
  %1257 = vmatpush1.msra.mxu0 0.0
  %1258 = vmatprep.subr.mxu0 0.0
  %1259 = vmatpush1.msra.mxu0 0.0
  %1260 = vmatprep.subr.mxu0 0.0
  %1261 = vmatpush1.msra.mxu0 0.0
  %1262 = vmatprep.subr.mxu0 0.0
  %1263 = vmatpush1.msra.mxu0 0.0
  %1264 = vmatprep.mubr.f32.mxu0 0.0
  %1265 = vmatmul.mubr.f32.gmra.mrb[0].mxu0 %v1189
  %v1266 = vpop.f32.mrb[0].mxu0
  %v1267 = vadd.f32 0.0, %v1266
  %v1268 = vpop.f32.mrb[0].mxu0
  %1269 = vmatprep.mubr.f32.mxu0 0.0
  %1270 = vmatmul.mubr.f32.gmra.mrb[0].mxu0 %v1192
  %v1271 = vpop.f32.mrb[0].mxu0
  %v1272 = vadd.f32 0.0, %v1271
  %v1273 = vpop.f32.mrb[0].mxu0
  %1274 = vmatprep.mubr.f32.mxu0 0.0
  %1275 = vmatmul.mubr.f32.gmra.mrb[0].mxu0 %v1195
  %v1276 = vpop.f32.mrb[0].mxu0
  %v1277 = vadd.f32 0.0, %v1276
  %v1278 = vpop.f32.mrb[0].mxu0
  %1279 = vmatprep.mubr.f32.mxu0 0.0
  %1280 = vmatmul.mubr.f32.gmra.mrb[0].mxu0 %v1198
  %v1281 = vpop.f32.mrb[0].mxu0
  %v1282 = vadd.f32 0.0, %v1281
  %v1283 = vpop.f32.mrb[0].mxu0
  %1284 = vdwg.mxu0
  %v1285 = vadd.f32 %v1155, %v1267
  %v1286 = vadd.f32 %v1156, %v1272
  %v1287 = vadd.f32 %v1157, %v1277
  %v1288 = vadd.f32 %v1158, %v1282
  %s1289 = scalar_lea.vmem %s3, 224
  %v1290 = vld [vmem:[%s1289] sm:$0xff]
  %v1291 = vld [vmem:[%s1289 + $0x8] sm:$0xff]
  %v1292 = vld [vmem:[%s1289 + $0x10] sm:$0xff]
  %v1293 = vld [vmem:[%s1289 + $0x18] sm:$0xff]
  %1294 = vrot.lane.b32.xlu0 %v363, 114
  %v1295 = vpop.permute.xlu0 %1294
  %1296 = vrot.lane.b32.xlu0 %v364, 114
  %v1297 = vpop.permute.xlu0 %1296
  %1298 = vrot.lane.b32.xlu0 %v365, 114
  %v1299 = vpop.permute.xlu0 %1298
  %1300 = vrot.lane.b32.xlu0 %v366, 114
  %v1301 = vpop.permute.xlu0 %1300
  %1302 = vrot.lane.b32.xlu0 %v367, 114
  %v1303 = vpop.permute.xlu0 %1302
  %1304 = vrot.lane.b32.xlu0 %v368, 114
  %v1305 = vpop.permute.xlu0 %1304
  %1306 = vrot.lane.b32.xlu0 %v369, 114
  %v1307 = vpop.permute.xlu0 %1306
  %1308 = vrot.lane.b32.xlu0 %v370, 114
  %v1309 = vpop.permute.xlu0 %1308
  %v1319 = vsel %vm379, %v1290, 0
  %v1322 = vsel %vm379, %v1291, 0
  %v1325 = vsel %vm379, %v1292, 0
  %v1328 = vsel %vm379, %v1293, 0
  %1330 = vmatprep.subr.mxu0 0.0
  %1331 = vmatpush1.msra.mxu0 %v1295
  %1332 = vmatprep.subr.mxu0 0.0
  %1333 = vmatpush1.msra.mxu0 %v1297
  %1334 = vmatprep.subr.mxu0 0.0
  %1335 = vmatpush1.msra.mxu0 %v1299
  %1336 = vmatprep.subr.mxu0 0.0
  %1337 = vmatpush1.msra.mxu0 %v1301
  %1338 = vmatprep.subr.mxu0 0.0
  %1339 = vmatpush1.msra.mxu0 %v1303
  %1340 = vmatprep.subr.mxu0 0.0
  %1341 = vmatpush1.msra.mxu0 %v1305
  %1342 = vmatprep.subr.mxu0 0.0
  %1343 = vmatpush1.msra.mxu0 %v1307
  %1344 = vmatprep.subr.mxu0 0.0
  %1345 = vmatpush1.msra.mxu0 %v1309
  %1346 = vmatprep.subr.mxu0 0.0
  %1347 = vmatpush1.msra.mxu0 0.0
  %1348 = vmatprep.subr.mxu0 0.0
  %1349 = vmatpush1.msra.mxu0 0.0
  %1350 = vmatprep.subr.mxu0 0.0
  %1351 = vmatpush1.msra.mxu0 0.0
  %1352 = vmatprep.subr.mxu0 0.0
  %1353 = vmatpush1.msra.mxu0 0.0
  %1354 = vmatprep.subr.mxu0 0.0
  %1355 = vmatpush1.msra.mxu0 0.0
  %1356 = vmatprep.subr.mxu0 0.0
  %1357 = vmatpush1.msra.mxu0 0.0
  %1358 = vmatprep.subr.mxu0 0.0
  %1359 = vmatpush1.msra.mxu0 0.0
  %1360 = vmatprep.subr.mxu0 0.0
  %1361 = vmatpush1.msra.mxu0 0.0
  %1362 = vmatprep.subr.mxu0 0.0
  %1363 = vmatpush1.msra.mxu0 0.0
  %1364 = vmatprep.subr.mxu0 0.0
  %1365 = vmatpush1.msra.mxu0 0.0
  %1366 = vmatprep.subr.mxu0 0.0
  %1367 = vmatpush1.msra.mxu0 0.0
  %1368 = vmatprep.subr.mxu0 0.0
  %1369 = vmatpush1.msra.mxu0 0.0
  %1370 = vmatprep.subr.mxu0 0.0
  %1371 = vmatpush1.msra.mxu0 0.0
  %1372 = vmatprep.subr.mxu0 0.0
  %1373 = vmatpush1.msra.mxu0 0.0
  %1374 = vmatprep.subr.mxu0 0.0
  %1375 = vmatpush1.msra.mxu0 0.0
  %1376 = vmatprep.subr.mxu0 0.0
  %1377 = vmatpush1.msra.mxu0 0.0
  %1378 = vmatprep.subr.mxu0 0.0
  %1379 = vmatpush1.msra.mxu0 0.0
  %1380 = vmatprep.subr.mxu0 0.0
  %1381 = vmatpush1.msra.mxu0 0.0
  %1382 = vmatprep.subr.mxu0 0.0
  %1383 = vmatpush1.msra.mxu0 0.0
  %1384 = vmatprep.subr.mxu0 0.0
  %1385 = vmatpush1.msra.mxu0 0.0
  %1386 = vmatprep.subr.mxu0 0.0
  %1387 = vmatpush1.msra.mxu0 0.0
  %1388 = vmatprep.subr.mxu0 0.0
  %1389 = vmatpush1.msra.mxu0 0.0
  %1390 = vmatprep.subr.mxu0 0.0
  %1391 = vmatpush1.msra.mxu0 0.0
  %1392 = vmatprep.subr.mxu0 0.0
  %1393 = vmatpush1.msra.mxu0 0.0
  %1394 = vmatprep.mubr.f32.mxu0 0.0
  %1395 = vmatmul.mubr.f32.gmra.mrb[0].mxu0 %v1319
  %v1396 = vpop.f32.mrb[0].mxu0
  %v1397 = vadd.f32 0.0, %v1396
  %v1398 = vpop.f32.mrb[0].mxu0
  %1399 = vmatprep.mubr.f32.mxu0 0.0
  %1400 = vmatmul.mubr.f32.gmra.mrb[0].mxu0 %v1322
  %v1401 = vpop.f32.mrb[0].mxu0
  %v1402 = vadd.f32 0.0, %v1401
  %v1403 = vpop.f32.mrb[0].mxu0
  %1404 = vmatprep.mubr.f32.mxu0 0.0
  %1405 = vmatmul.mubr.f32.gmra.mrb[0].mxu0 %v1325
  %v1406 = vpop.f32.mrb[0].mxu0
  %v1407 = vadd.f32 0.0, %v1406
  %v1408 = vpop.f32.mrb[0].mxu0
  %1409 = vmatprep.mubr.f32.mxu0 0.0
  %1410 = vmatmul.mubr.f32.gmra.mrb[0].mxu0 %v1328
  %v1411 = vpop.f32.mrb[0].mxu0
  %v1412 = vadd.f32 0.0, %v1411
  %v1413 = vpop.f32.mrb[0].mxu0
  %1414 = vdwg.mxu0
  %v1415 = vadd.f32 %v1285, %v1397
  %v1416 = vadd.f32 %v1286, %v1402
  %v1417 = vadd.f32 %v1287, %v1407
  %v1418 = vadd.f32 %v1288, %v1412
  %s1419 = scalar_lea.vmem %s3, 256
  %v1420 = vld [vmem:[%s1419] sm:$0xff]
  %v1421 = vld [vmem:[%s1419 + $0x8] sm:$0xff]
  %v1422 = vld [vmem:[%s1419 + $0x10] sm:$0xff]
  %v1423 = vld [vmem:[%s1419 + $0x18] sm:$0xff]
  %1424 = vrot.lane.b32.xlu0 %v363, 112
  %v1425 = vpop.permute.xlu0 %1424
  %1426 = vrot.lane.b32.xlu0 %v364, 112
  %v1427 = vpop.permute.xlu0 %1426
  %1428 = vrot.lane.b32.xlu0 %v365, 112
  %v1429 = vpop.permute.xlu0 %1428
  %1430 = vrot.lane.b32.xlu0 %v366, 112
  %v1431 = vpop.permute.xlu0 %1430
  %1432 = vrot.lane.b32.xlu0 %v367, 112
  %v1433 = vpop.permute.xlu0 %1432
  %1434 = vrot.lane.b32.xlu0 %v368, 112
  %v1435 = vpop.permute.xlu0 %1434
  %1436 = vrot.lane.b32.xlu0 %v369, 112
  %v1437 = vpop.permute.xlu0 %1436
  %1438 = vrot.lane.b32.xlu0 %v370, 112
  %v1439 = vpop.permute.xlu0 %1438
  %v1449 = vsel %vm379, %v1420, 0
  %v1452 = vsel %vm379, %v1421, 0
  %v1455 = vsel %vm379, %v1422, 0
  %v1458 = vsel %vm379, %v1423, 0
  %1460 = vmatprep.subr.mxu0 0.0
  %1461 = vmatpush1.msra.mxu0 %v1425
  %1462 = vmatprep.subr.mxu0 0.0
  %1463 = vmatpush1.msra.mxu0 %v1427
  %1464 = vmatprep.subr.mxu0 0.0
  %1465 = vmatpush1.msra.mxu0 %v1429
  %1466 = vmatprep.subr.mxu0 0.0
  %1467 = vmatpush1.msra.mxu0 %v1431
  %1468 = vmatprep.subr.mxu0 0.0
  %1469 = vmatpush1.msra.mxu0 %v1433
  %1470 = vmatprep.subr.mxu0 0.0
  %1471 = vmatpush1.msra.mxu0 %v1435
  %1472 = vmatprep.subr.mxu0 0.0
  %1473 = vmatpush1.msra.mxu0 %v1437
  %1474 = vmatprep.subr.mxu0 0.0
  %1475 = vmatpush1.msra.mxu0 %v1439
  %1476 = vmatprep.subr.mxu0 0.0
  %1477 = vmatpush1.msra.mxu0 0.0
  %1478 = vmatprep.subr.mxu0 0.0
  %1479 = vmatpush1.msra.mxu0 0.0
  %1480 = vmatprep.subr.mxu0 0.0
  %1481 = vmatpush1.msra.mxu0 0.0
  %1482 = vmatprep.subr.mxu0 0.0
  %1483 = vmatpush1.msra.mxu0 0.0
  %1484 = vmatprep.subr.mxu0 0.0
  %1485 = vmatpush1.msra.mxu0 0.0
  %1486 = vmatprep.subr.mxu0 0.0
  %1487 = vmatpush1.msra.mxu0 0.0
  %1488 = vmatprep.subr.mxu0 0.0
  %1489 = vmatpush1.msra.mxu0 0.0
  %1490 = vmatprep.subr.mxu0 0.0
  %1491 = vmatpush1.msra.mxu0 0.0
  %1492 = vmatprep.subr.mxu0 0.0
  %1493 = vmatpush1.msra.mxu0 0.0
  %1494 = vmatprep.subr.mxu0 0.0
  %1495 = vmatpush1.msra.mxu0 0.0
  %1496 = vmatprep.subr.mxu0 0.0
  %1497 = vmatpush1.msra.mxu0 0.0
  %1498 = vmatprep.subr.mxu0 0.0
  %1499 = vmatpush1.msra.mxu0 0.0
  %1500 = vmatprep.subr.mxu0 0.0
  %1501 = vmatpush1.msra.mxu0 0.0
  %1502 = vmatprep.subr.mxu0 0.0
  %1503 = vmatpush1.msra.mxu0 0.0
  %1504 = vmatprep.subr.mxu0 0.0
  %1505 = vmatpush1.msra.mxu0 0.0
  %1506 = vmatprep.subr.mxu0 0.0
  %1507 = vmatpush1.msra.mxu0 0.0
  %1508 = vmatprep.subr.mxu0 0.0
  %1509 = vmatpush1.msra.mxu0 0.0
  %1510 = vmatprep.subr.mxu0 0.0
  %1511 = vmatpush1.msra.mxu0 0.0
  %1512 = vmatprep.subr.mxu0 0.0
  %1513 = vmatpush1.msra.mxu0 0.0
  %1514 = vmatprep.subr.mxu0 0.0
  %1515 = vmatpush1.msra.mxu0 0.0
  %1516 = vmatprep.subr.mxu0 0.0
  %1517 = vmatpush1.msra.mxu0 0.0
  %1518 = vmatprep.subr.mxu0 0.0
  %1519 = vmatpush1.msra.mxu0 0.0
  %1520 = vmatprep.subr.mxu0 0.0
  %1521 = vmatpush1.msra.mxu0 0.0
  %1522 = vmatprep.subr.mxu0 0.0
  %1523 = vmatpush1.msra.mxu0 0.0
  %1524 = vmatprep.mubr.f32.mxu0 0.0
  %1525 = vmatmul.mubr.f32.gmra.mrb[0].mxu0 %v1449
  %v1526 = vpop.f32.mrb[0].mxu0
  %v1527 = vadd.f32 0.0, %v1526
  %v1528 = vpop.f32.mrb[0].mxu0
  %1529 = vmatprep.mubr.f32.mxu0 0.0
  %1530 = vmatmul.mubr.f32.gmra.mrb[0].mxu0 %v1452
  %v1531 = vpop.f32.mrb[0].mxu0
  %v1532 = vadd.f32 0.0, %v1531
  %v1533 = vpop.f32.mrb[0].mxu0
  %1534 = vmatprep.mubr.f32.mxu0 0.0
  %1535 = vmatmul.mubr.f32.gmra.mrb[0].mxu0 %v1455
  %v1536 = vpop.f32.mrb[0].mxu0
  %v1537 = vadd.f32 0.0, %v1536
  %v1538 = vpop.f32.mrb[0].mxu0
  %1539 = vmatprep.mubr.f32.mxu0 0.0
  %1540 = vmatmul.mubr.f32.gmra.mrb[0].mxu0 %v1458
  %v1541 = vpop.f32.mrb[0].mxu0
  %v1542 = vadd.f32 0.0, %v1541
  %v1543 = vpop.f32.mrb[0].mxu0
  %1544 = vdwg.mxu0
  %v1545 = vadd.f32 %v1415, %v1527
  %v1546 = vadd.f32 %v1416, %v1532
  %v1547 = vadd.f32 %v1417, %v1537
  %v1548 = vadd.f32 %v1418, %v1542
  %vm1549 = vcmask 15360
  %1550 = vst.msk [vmem:[%s5] sm:$0xff] %vm1549, %v1545
  %1551 = vst.msk [vmem:[%s5 + $0x8] sm:$0xff] %vm1549, %v1546
  %1552 = vst.msk [vmem:[%s5 + $0x10] sm:$0xff] %vm1549, %v1547
  %1553 = vst.msk [vmem:[%s5 + $0x18] sm:$0xff] %vm1549, %v1548
  // Predicated region
  $region22: #{encoder_forward.7} parent=0 // pred_check
    _
  $region23: #{encoder_forward.7} parent=0 // pred_check_branch
    %1555 = sbr.rel (0) target = $region25
  $region24: #{encoder_forward.7} parent=0 // pred_region
    _
  $region25: #{encoder_forward.7} parent=0 // pred_fallthru
    _
  // Predicated region
  $region26: #{encoder_forward.7} parent=0 // pred_check
    _
  $region27: #{encoder_forward.7} parent=0 // pred_check_branch
    %1557 = sbr.rel (0) target = $region29
  $region28: #{encoder_forward.7} parent=0 // pred_region
    _
  $region29: #{encoder_forward.7} parent=0 // pred_fallthru
    _

</llo_original>
